<compile_context>
chip_gen: v7x
topology: tpu7x:2x2x1
jax: 0.10.0
libtpu: 0.0.40
codegen_flags: <defaults>
</compile_context>

<pallas_src>
import math
import jax
import jax.numpy as jnp
import numpy as np
from jax.experimental import pallas as pl
from jax.experimental.pallas import tpu as pltpu  # noqa: F401  (no grid/DMA needed at these sizes)

# ------------------------- model config (small, synthetic) -------------------
B, L, D, H, DFF = 2, 8, 32, 4, 64
DH = D // H
EPS = 1e-5
N_LAYERS = 2
DTYPE = jnp.float32
SCALE = 1.0 / math.sqrt(DH)

# vector-slab row layout (one (8, 128) slab per layer, everything at lane 0)
ROW_BQKV, ROW_BO, ROW_B1, ROW_B2 = 0, 1, 2, 3
ROW_G1, ROW_BE1, ROW_G2, ROW_BE2 = 4, 5, 6, 7


def _layer_norm(x, gamma, beta):
    mu = jnp.mean(x, axis=-1, keepdims=True)
    var = jnp.mean((x - mu) ** 2, axis=-1, keepdims=True)
    return (x - mu) * jax.lax.rsqrt(var + EPS) * gamma + beta


# ------------------------------ fused Pallas kernel ---------------------------
def encoder_kernel(x_ref, wqkv_ref, wo_ref, w1_ref, w2_ref, vec_ref, fnorm_ref,
                   mask_kv_ref, msum_ref, out_ref, attn_ref):
    xf = x_ref[...].astype(jnp.float32)            # (B*L, D)
    mask_kv = mask_kv_ref[...]                     # (H*L, D)   block-diag head mask
    msum = msum_ref[...]                           # (H*L, H*L) per-head block-sum matrix

    attn_pieces = []                               # (L, H*L) pieces, layer-major then batch

    for layer in range(N_LAYERS):                  # static unroll over layers
        wqkv = wqkv_ref[layer]                     # (D, 3D)   [Wq*scale | Wk | Wv]
        wo = wo_ref[layer]                         # (D, D)
        w1 = w1_ref[layer]                         # (D, DFF)
        w2 = w2_ref[layer]                         # (DFF, D)
        vec = vec_ref[layer]                       # (8, 128)  biases / gammas / betas

        # --- fused Q/K/V projection: one (B*L, D) @ (D, 3D) matmul -----------
        qkv = jnp.dot(xf, wqkv, preferred_element_type=jnp.float32) \
            + vec[ROW_BQKV:ROW_BQKV + 1, :3 * D]
        q = qkv[:, 0 * D:1 * D]                    # 1/sqrt(d_head) already folded in
        k = qkv[:, 1 * D:2 * D]
        v = qkv[:, 2 * D:3 * D]

        # --- attention via head-block-diagonal K / V (no head split/merge) ---
        ctx_rows = []
        for b in range(B):                         # static unroll, tiny B
            qb = q[b * L:(b + 1) * L, :]           # (L, D)  sublane-aligned row slice
            kb = k[b * L:(b + 1) * L, :]
            vb = v[b * L:(b + 1) * L, :]

            kblk = jnp.concatenate([kb] * H, axis=0) * mask_kv   # (H*L, D)
            vblk = jnp.concatenate([vb] * H, axis=0) * mask_kv   # (H*L, D)

            # scores[l, h*L + m] = sum_{d in head h} q[l,d] k[m,d]
            s = jnp.einsum('ld,cd->lc', qb, kblk,
                           preferred_element_type=jnp.float32)   # (L, H*L)
            # per-row shift (constant within each head block -> softmax-invariant)
            s = s - jnp.max(s, axis=-1, keepdims=True)
            e = jnp.exp(s)
            denom = jnp.dot(e, msum, preferred_element_type=jnp.float32)
            a = e / denom                                        # exact softmax probs

            attn_pieces.append(a)
            # ctx lands directly in (L, D) = (L, H*DH) layout — no head merge
            ctx_rows.append(jnp.dot(a, vblk, preferred_element_type=jnp.float32))

        ctx = jnp.concatenate(ctx_rows, axis=0)                  # (B*L, D)

        # --- output projection: single (B*L, D) @ (D, D) matmul --------------
        new_x = jnp.dot(ctx, wo, preferred_element_type=jnp.float32) \
            + vec[ROW_BO:ROW_BO + 1, :D]

        # residual + LayerNorm 1  (dropout == identity in eval)
        x1 = _layer_norm(xf + new_x,
                         vec[ROW_G1:ROW_G1 + 1, :D], vec[ROW_BE1:ROW_BE1 + 1, :D])

        # --- FFN: Conv1d(k=1) -> relu -> Conv1d(k=1), residual + LayerNorm 2 -
        y = jnp.dot(x1, w1, preferred_element_type=jnp.float32) \
            + vec[ROW_B1:ROW_B1 + 1, :DFF]
        y = jnp.maximum(y, 0.0)
        y = jnp.dot(y, w2, preferred_element_type=jnp.float32) \
            + vec[ROW_B2:ROW_B2 + 1, :D]
        xf = _layer_norm(x1 + y,
                         vec[ROW_G2:ROW_G2 + 1, :D], vec[ROW_BE2:ROW_BE2 + 1, :D])

    # --- Encoder-level final LayerNorm ---
    out = _layer_norm(xf, fnorm_ref[0:1, :D], fnorm_ref[1:2, :D])

    # --- lane-dense stores ---
    out_ref[...] = jnp.concatenate(
        [out[bb * L:(bb + 1) * L, :] for bb in range(B)], axis=1
    ).astype(out_ref.dtype)                                        # (L, B*D)
    attn_ref[...] = jnp.concatenate(attn_pieces, axis=1)           # (L, NL*B*H*L) = (8, 128)


# ------------------------------- param packing ---------------------------------
def pack_params(layer_params):
    wqkv_l, wo_l, w1_l, w2_l, vec_l = [], [], [], [], []
    for p in layer_params:
        wq, bq, wk, bk, wv, bv, wo, bo, w1, b1, w2, b2, g1, be1, g2, be2 = p
        # 1/sqrt(d_head) folded into the Q weight/bias columns (one-time, weights)
        wqkv_l.append(jnp.concatenate([wq * SCALE, wk, wv], axis=1))   # (D, 3D)
        wo_l.append(wo)
        w1_l.append(w1)
        w2_l.append(w2)
        vec = jnp.zeros((8, 128), jnp.float32)
        vec = vec.at[ROW_BQKV, :3 * D].set(
            jnp.concatenate([bq[0] * SCALE, bk[0], bv[0]], axis=0))
        vec = vec.at[ROW_BO, :D].set(bo[0])
        vec = vec.at[ROW_B1, :DFF].set(b1[0])
        vec = vec.at[ROW_B2, :D].set(b2[0])
        vec = vec.at[ROW_G1, :D].set(g1[0])
        vec = vec.at[ROW_BE1, :D].set(be1[0])
        vec = vec.at[ROW_G2, :D].set(g2[0])
        vec = vec.at[ROW_BE2, :D].set(be2[0])
        vec_l.append(vec)
    return (jnp.stack(wqkv_l), jnp.stack(wo_l), jnp.stack(w1_l),
            jnp.stack(w2_l), jnp.stack(vec_l))


def _block_diag_masks():
    r = np.arange(H * L)[:, None]
    c = np.arange(D)[None, :]
    mask_kv = (r // L == c // DH).astype(np.float32)       # (H*L, D)
    r2 = np.arange(H * L)[:, None]
    c2 = np.arange(H * L)[None, :]
    msum = (r2 // L == c2 // L).astype(np.float32)          # (H*L, H*L)
    return jnp.asarray(mask_kv), jnp.asarray(msum)


# ------------------------------- wrapper ---------------------------------------
def encoder_forward(x, layer_params, norm_gamma, norm_beta):
    """Encoder.forward with conv_layers=None and norm_layer=LayerNorm(d_model)."""
    wqkv_all, wo_all, w1_all, w2_all, vec_all = pack_params(layer_params)
    mask_kv, msum = _block_diag_masks()

    fnorm = jnp.zeros((8, 128), jnp.float32)
    fnorm = fnorm.at[0, :D].set(norm_gamma[0])
    fnorm = fnorm.at[1, :D].set(norm_beta[0])

    # Single fused pallas_call; everything (<0.2 MiB) is VMEM-resident, so full
    # arrays are mapped in with grid=() (no per-batch grid, no pipelining).
    # Deliberately single-TensorCore at B=2, L=8 (too small to amortize a split).
    out_dense, attn_dense = pl.pallas_call(
        encoder_kernel,
        out_shape=(jax.ShapeDtypeStruct((L, B * D), x.dtype),
                   jax.ShapeDtypeStruct((L, N_LAYERS * B * H * L), jnp.float32)),
    )(x.reshape(B * L, D), wqkv_all, wo_all, w1_all, w2_all, vec_all, fnorm,
      mask_kv, msum)

    # undo lane-dense packing (plain XLA, outside the kernel)
    out = out_dense.reshape(L, B, D).transpose(1, 0, 2)                 # (B, L, D)
    attn = attn_dense.reshape(L, N_LAYERS, B, H, L).transpose(1, 2, 3, 0, 4)
    return out, [attn[i] for i in range(N_LAYERS)]


# -------------------------- deterministic param init ---------------------------
def init_layer_params(key):
    ks = jax.random.split(key, 13)
    s = 0.02
    wq = s * jax.random.normal(ks[0], (D, D), DTYPE)
    bq = s * jax.random.normal(ks[1], (1, D), DTYPE)
    wk = s * jax.random.normal(ks[2], (D, D), DTYPE)
    bk = s * jax.random.normal(ks[3], (1, D), DTYPE)
    wv = s * jax.random.normal(ks[4], (D, D), DTYPE)
    bv = s * jax.random.normal(ks[5], (1, D), DTYPE)
    wo = s * jax.random.normal(ks[6], (D, D), DTYPE)
    bo = s * jax.random.normal(ks[7], (1, D), DTYPE)
    w1 = s * jax.random.normal(ks[8], (D, DFF), DTYPE)
    b1 = s * jax.random.normal(ks[9], (1, DFF), DTYPE)
    w2 = s * jax.random.normal(ks[10], (DFF, D), DTYPE)
    b2 = s * jax.random.normal(ks[11], (1, D), DTYPE)
    g1 = jnp.ones((1, D), DTYPE)
    be1 = jnp.zeros((1, D), DTYPE)
    g2 = jnp.ones((1, D), DTYPE)
    be2 = jnp.zeros((1, D), DTYPE)
    return [wq, bq, wk, bk, wv, bv, wo, bo, w1, b1, w2, b2, g1, be1, g2, be2]


# --------------------------- pure-JAX reference (check) ------------------------
def ref_layer(x, p):
    wq, bq, wk, bk, wv, bv, wo, bo, w1, b1, w2, b2, g1, be1, g2, be2 = p
    q = x @ wq + bq
    k = x @ wk + bk
    v = x @ wv + bv
    qh = q.reshape(B, L, H, DH).transpose(0, 2, 1, 3)
    kh = k.reshape(B, L, H, DH).transpose(0, 2, 1, 3)
    vh = v.reshape(B, L, H, DH).transpose(0, 2, 1, 3)
    s = jnp.einsum("bhld,bhsd->bhls", qh, kh) / math.sqrt(DH)
    a = jax.nn.softmax(s, axis=-1)
    o = jnp.einsum("bhls,bhsd->bhld", a, vh).transpose(0, 2, 1, 3).reshape(B, L, D)
    new_x = o @ wo + bo
    x1 = _layer_norm(x + new_x, g1, be1)
    y = jnp.maximum(x1 @ w1 + b1, 0.0) @ w2 + b2
    return _layer_norm(x1 + y, g2, be2), a


def ref_encoder(x, layer_params, g, b):
    attns = []
    for p in layer_params:
        x, a = ref_layer(x, p)
        attns.append(a)
    return _layer_norm(x, g, b), attns


# ----------------------------------- main ---------------------------------------
if __name__ == "__main__":
    root = jax.random.PRNGKey(0)
    kx, *lkeys = jax.random.split(root, N_LAYERS + 1)
    x = jax.random.normal(kx, (B, L, D), DTYPE)

    layer_params = [init_layer_params(k) for k in lkeys]
    norm_gamma = jnp.ones((1, D), DTYPE)
    norm_beta = jnp.zeros((1, D), DTYPE)

    out, attns = encoder_forward(x, layer_params, norm_gamma, norm_beta)
    out = jax.block_until_ready(out)
    attns = [jax.block_until_ready(a) for a in attns]

    # sanity check against a plain-JAX reference (exact softmax, all f32)
    ref_out, ref_attns = ref_encoder(x, layer_params, norm_gamma, norm_beta)
    np.testing.assert_allclose(np.asarray(out), np.asarray(ref_out),
                               atol=1e-3, rtol=1e-3)
    for a, ra in zip(attns, ref_attns):
        np.testing.assert_allclose(np.asarray(a), np.asarray(ra),
                                   atol=1e-3, rtol=1e-3)

    print("KERNEL_OK")
</pallas_src>

<mosaic_0001>
module attributes {stable_mosaic.version = 11 : i64} {
  func.func @encoder_kernel(%arg0: memref<16x32xf32, #tpu.memory_space<vmem>>, %arg1: memref<2x32x96xf32, #tpu.memory_space<vmem>>, %arg2: memref<2x32x32xf32, #tpu.memory_space<vmem>>, %arg3: memref<2x32x64xf32, #tpu.memory_space<vmem>>, %arg4: memref<2x64x32xf32, #tpu.memory_space<vmem>>, %arg5: memref<2x8x128xf32, #tpu.memory_space<vmem>>, %arg6: memref<8x128xf32, #tpu.memory_space<vmem>>, %arg7: memref<32x32xf32, #tpu.memory_space<vmem>>, %arg8: memref<32x32xf32, #tpu.memory_space<vmem>>, %arg9: memref<8x64xf32, #tpu.memory_space<vmem>>, %arg10: memref<8x128xf32, #tpu.memory_space<vmem>>) attributes {dimension_semantics = [], scalar_prefetch = 0 : i64, scratch_operands = 0 : i64, tpu.core_type = #tpu.core_type<tc>} {
    %c0 = arith.constant 0 : index
    %c0_0 = arith.constant 0 : index
    %0 = vector.load %arg0[%c0, %c0_0] : memref<16x32xf32, #tpu.memory_space<vmem>>, vector<16x32xf32>
    %c0_1 = arith.constant 0 : index
    %c0_2 = arith.constant 0 : index
    %1 = vector.load %arg7[%c0_1, %c0_2] : memref<32x32xf32, #tpu.memory_space<vmem>>, vector<32x32xf32>
    %c0_3 = arith.constant 0 : index
    %c0_4 = arith.constant 0 : index
    %2 = vector.load %arg8[%c0_3, %c0_4] : memref<32x32xf32, #tpu.memory_space<vmem>>, vector<32x32xf32>
    %c0_5 = arith.constant 0 : index
    %c0_6 = arith.constant 0 : index
    %c0_7 = arith.constant 0 : index
    %3 = vector.load %arg1[%c0_5, %c0_6, %c0_7] : memref<2x32x96xf32, #tpu.memory_space<vmem>>, vector<1x32x96xf32>
    %4 = vector.shape_cast %3 : vector<1x32x96xf32> to vector<32x96xf32>
    %c0_8 = arith.constant 0 : index
    %c0_9 = arith.constant 0 : index
    %c0_10 = arith.constant 0 : index
    %5 = vector.load %arg2[%c0_8, %c0_9, %c0_10] : memref<2x32x32xf32, #tpu.memory_space<vmem>>, vector<1x32x32xf32>
    %6 = vector.shape_cast %5 : vector<1x32x32xf32> to vector<32x32xf32>
    %c0_11 = arith.constant 0 : index
    %c0_12 = arith.constant 0 : index
    %c0_13 = arith.constant 0 : index
    %7 = vector.load %arg3[%c0_11, %c0_12, %c0_13] : memref<2x32x64xf32, #tpu.memory_space<vmem>>, vector<1x32x64xf32>
    %8 = vector.shape_cast %7 : vector<1x32x64xf32> to vector<32x64xf32>
    %c0_14 = arith.constant 0 : index
    %c0_15 = arith.constant 0 : index
    %c0_16 = arith.constant 0 : index
    %9 = vector.load %arg4[%c0_14, %c0_15, %c0_16] : memref<2x64x32xf32, #tpu.memory_space<vmem>>, vector<1x64x32xf32>
    %10 = vector.shape_cast %9 : vector<1x64x32xf32> to vector<64x32xf32>
    %c0_17 = arith.constant 0 : index
    %c0_18 = arith.constant 0 : index
    %c0_19 = arith.constant 0 : index
    %11 = vector.load %arg5[%c0_17, %c0_18, %c0_19] : memref<2x8x128xf32, #tpu.memory_space<vmem>>, vector<1x8x128xf32>
    %12 = vector.shape_cast %11 : vector<1x8x128xf32> to vector<8x128xf32>
    %cst = arith.constant dense<0.000000e+00> : vector<16x96xf32>
    %13 = tpu.matmul %0, %4, %cst {dimension_numbers = #tpu.dot_dimension_numbers<[1], [0], [0], [1], [0, 0, 1, 1], [], []>} : vector<16x32xf32>, vector<32x96xf32>, vector<16x96xf32> -> vector<16x96xf32>
    %14 = vector.extract_strided_slice %12 {offsets = [0, 0], sizes = [1, 96], strides = [1, 1]} : vector<8x128xf32> to vector<1x96xf32>
    %15 = vector.broadcast %14 : vector<1x96xf32> to vector<16x96xf32>
    %16 = arith.addf %13, %15 : vector<16x96xf32>
    %17 = vector.extract_strided_slice %16 {offsets = [0, 0], sizes = [16, 32], strides = [1, 1]} : vector<16x96xf32> to vector<16x32xf32>
    %18 = vector.extract_strided_slice %16 {offsets = [0, 32], sizes = [16, 32], strides = [1, 1]} : vector<16x96xf32> to vector<16x32xf32>
    %19 = vector.extract_strided_slice %16 {offsets = [0, 64], sizes = [16, 32], strides = [1, 1]} : vector<16x96xf32> to vector<16x32xf32>
    %20 = vector.extract_strided_slice %17 {offsets = [0, 0], sizes = [8, 32], strides = [1, 1]} : vector<16x32xf32> to vector<8x32xf32>
    %21 = vector.extract_strided_slice %18 {offsets = [0, 0], sizes = [8, 32], strides = [1, 1]} : vector<16x32xf32> to vector<8x32xf32>
    %22 = vector.extract_strided_slice %19 {offsets = [0, 0], sizes = [8, 32], strides = [1, 1]} : vector<16x32xf32> to vector<8x32xf32>
    %23 = tpu.concatenate %21, %21, %21, %21 in 0 : vector<8x32xf32>, vector<8x32xf32>, vector<8x32xf32>, vector<8x32xf32> -> vector<32x32xf32>
    %24 = arith.mulf %23, %1 : vector<32x32xf32>
    %25 = tpu.concatenate %22, %22, %22, %22 in 0 : vector<8x32xf32>, vector<8x32xf32>, vector<8x32xf32>, vector<8x32xf32> -> vector<32x32xf32>
    %26 = arith.mulf %25, %1 : vector<32x32xf32>
    "tpu.trace_start"() <{level = 10 : i32, message = "ld,cd->lc"}> : () -> ()
    %cst_20 = arith.constant dense<0.000000e+00> : vector<8x32xf32>
    %27 = tpu.matmul %20, %24, %cst_20 {dimension_numbers = #tpu.dot_dimension_numbers<[1], [1], [0], [0], [0, 0, 1, 0], [], []>} : vector<8x32xf32>, vector<32x32xf32>, vector<8x32xf32> -> vector<8x32xf32>
    "tpu.trace_stop"() : () -> ()
    %cst_21 = arith.constant dense<0xFF800000> : vector<8xf32>
    %28 = vector.multi_reduction <maximumf>, %27, %cst_21 [1] : vector<8x32xf32> to vector<8xf32>
    %29 = vector.shape_cast %28 : vector<8xf32> to vector<8x1xf32>
    %30 = vector.broadcast %29 : vector<8x1xf32> to vector<8x32xf32>
    %31 = arith.subf %27, %30 : vector<8x32xf32>
    %32 = math.exp %31 : vector<8x32xf32>
    %cst_22 = arith.constant dense<0.000000e+00> : vector<8x32xf32>
    %33 = tpu.matmul %32, %2, %cst_22 {dimension_numbers = #tpu.dot_dimension_numbers<[1], [0], [0], [1], [0, 0, 1, 1], [], []>} : vector<8x32xf32>, vector<32x32xf32>, vector<8x32xf32> -> vector<8x32xf32>
    %34 = arith.divf %32, %33 : vector<8x32xf32>
    %cst_23 = arith.constant dense<0.000000e+00> : vector<8x32xf32>
    %35 = tpu.matmul %34, %26, %cst_23 {dimension_numbers = #tpu.dot_dimension_numbers<[1], [0], [0], [1], [0, 0, 1, 1], [], []>} : vector<8x32xf32>, vector<32x32xf32>, vector<8x32xf32> -> vector<8x32xf32>
    %36 = vector.extract_strided_slice %17 {offsets = [8, 0], sizes = [8, 32], strides = [1, 1]} : vector<16x32xf32> to vector<8x32xf32>
    %37 = vector.extract_strided_slice %18 {offsets = [8, 0], sizes = [8, 32], strides = [1, 1]} : vector<16x32xf32> to vector<8x32xf32>
    %38 = vector.extract_strided_slice %19 {offsets = [8, 0], sizes = [8, 32], strides = [1, 1]} : vector<16x32xf32> to vector<8x32xf32>
    %39 = tpu.concatenate %37, %37, %37, %37 in 0 : vector<8x32xf32>, vector<8x32xf32>, vector<8x32xf32>, vector<8x32xf32> -> vector<32x32xf32>
    %40 = arith.mulf %39, %1 : vector<32x32xf32>
    %41 = tpu.concatenate %38, %38, %38, %38 in 0 : vector<8x32xf32>, vector<8x32xf32>, vector<8x32xf32>, vector<8x32xf32> -> vector<32x32xf32>
    %42 = arith.mulf %41, %1 : vector<32x32xf32>
    "tpu.trace_start"() <{level = 10 : i32, message = "ld,cd->lc"}> : () -> ()
    %cst_24 = arith.constant dense<0.000000e+00> : vector<8x32xf32>
    %43 = tpu.matmul %36, %40, %cst_24 {dimension_numbers = #tpu.dot_dimension_numbers<[1], [1], [0], [0], [0, 0, 1, 0], [], []>} : vector<8x32xf32>, vector<32x32xf32>, vector<8x32xf32> -> vector<8x32xf32>
    "tpu.trace_stop"() : () -> ()
    %cst_25 = arith.constant dense<0xFF800000> : vector<8xf32>
    %44 = vector.multi_reduction <maximumf>, %43, %cst_25 [1] : vector<8x32xf32> to vector<8xf32>
    %45 = vector.shape_cast %44 : vector<8xf32> to vector<8x1xf32>
    %46 = vector.broadcast %45 : vector<8x1xf32> to vector<8x32xf32>
    %47 = arith.subf %43, %46 : vector<8x32xf32>
    %48 = math.exp %47 : vector<8x32xf32>
    %cst_26 = arith.constant dense<0.000000e+00> : vector<8x32xf32>
    %49 = tpu.matmul %48, %2, %cst_26 {dimension_numbers = #tpu.dot_dimension_numbers<[1], [0], [0], [1], [0, 0, 1, 1], [], []>} : vector<8x32xf32>, vector<32x32xf32>, vector<8x32xf32> -> vector<8x32xf32>
    %50 = arith.divf %48, %49 : vector<8x32xf32>
    %cst_27 = arith.constant dense<0.000000e+00> : vector<8x32xf32>
    %51 = tpu.matmul %50, %42, %cst_27 {dimension_numbers = #tpu.dot_dimension_numbers<[1], [0], [0], [1], [0, 0, 1, 1], [], []>} : vector<8x32xf32>, vector<32x32xf32>, vector<8x32xf32> -> vector<8x32xf32>
    %52 = tpu.concatenate %35, %51 in 0 : vector<8x32xf32>, vector<8x32xf32> -> vector<16x32xf32>
    %cst_28 = arith.constant dense<0.000000e+00> : vector<16x32xf32>
    %53 = tpu.matmul %52, %6, %cst_28 {dimension_numbers = #tpu.dot_dimension_numbers<[1], [0], [0], [1], [0, 0, 1, 1], [], []>} : vector<16x32xf32>, vector<32x32xf32>, vector<16x32xf32> -> vector<16x32xf32>
    %54 = vector.extract_strided_slice %12 {offsets = [1, 0], sizes = [1, 32], strides = [1, 1]} : vector<8x128xf32> to vector<1x32xf32>
    %55 = vector.broadcast %54 : vector<1x32xf32> to vector<16x32xf32>
    %56 = arith.addf %53, %55 : vector<16x32xf32>
    %57 = arith.addf %0, %56 : vector<16x32xf32>
    %58 = vector.extract_strided_slice %12 {offsets = [4, 0], sizes = [1, 32], strides = [1, 1]} : vector<8x128xf32> to vector<1x32xf32>
    %59 = vector.extract_strided_slice %12 {offsets = [5, 0], sizes = [1, 32], strides = [1, 1]} : vector<8x128xf32> to vector<1x32xf32>
    %cst_29 = arith.constant dense<0.000000e+00> : vector<16xf32>
    %60 = vector.multi_reduction <add>, %57, %cst_29 [1] : vector<16x32xf32> to vector<16xf32>
    %61 = vector.shape_cast %60 : vector<16xf32> to vector<16x1xf32>
    %cst_30 = arith.constant 3.200000e+01 : f32
    %62 = vector.broadcast %cst_30 : f32 to vector<16x1xf32>
    %63 = arith.divf %61, %62 : vector<16x1xf32>
    %64 = vector.broadcast %63 : vector<16x1xf32> to vector<16x32xf32>
    %65 = arith.subf %57, %64 : vector<16x32xf32>
    %66 = arith.mulf %65, %65 : vector<16x32xf32>
    %cst_31 = arith.constant dense<0.000000e+00> : vector<16xf32>
    %67 = vector.multi_reduction <add>, %66, %cst_31 [1] : vector<16x32xf32> to vector<16xf32>
    %68 = vector.shape_cast %67 : vector<16xf32> to vector<16x1xf32>
    %cst_32 = arith.constant 3.200000e+01 : f32
    %69 = vector.broadcast %cst_32 : f32 to vector<16x1xf32>
    %70 = arith.divf %68, %69 : vector<16x1xf32>
    %71 = vector.broadcast %63 : vector<16x1xf32> to vector<16x32xf32>
    %72 = arith.subf %57, %71 : vector<16x32xf32>
    %cst_33 = arith.constant 9.99999974E-6 : f32
    %73 = vector.broadcast %cst_33 : f32 to vector<16x1xf32>
    %74 = arith.addf %70, %73 : vector<16x1xf32>
    %75 = math.rsqrt %74 : vector<16x1xf32>
    %76 = vector.broadcast %75 : vector<16x1xf32> to vector<16x32xf32>
    %77 = arith.mulf %72, %76 : vector<16x32xf32>
    %78 = vector.broadcast %58 : vector<1x32xf32> to vector<16x32xf32>
    %79 = arith.mulf %77, %78 : vector<16x32xf32>
    %80 = vector.broadcast %59 : vector<1x32xf32> to vector<16x32xf32>
    %81 = arith.addf %79, %80 : vector<16x32xf32>
    %cst_34 = arith.constant dense<0.000000e+00> : vector<16x64xf32>
    %82 = tpu.matmul %81, %8, %cst_34 {dimension_numbers = #tpu.dot_dimension_numbers<[1], [0], [0], [1], [0, 0, 1, 1], [], []>} : vector<16x32xf32>, vector<32x64xf32>, vector<16x64xf32> -> vector<16x64xf32>
    %83 = vector.extract_strided_slice %12 {offsets = [2, 0], sizes = [1, 64], strides = [1, 1]} : vector<8x128xf32> to vector<1x64xf32>
    %84 = vector.broadcast %83 : vector<1x64xf32> to vector<16x64xf32>
    %85 = arith.addf %82, %84 : vector<16x64xf32>
    %cst_35 = arith.constant 0.000000e+00 : f32
    %86 = vector.broadcast %cst_35 : f32 to vector<16x64xf32>
    %87 = arith.maximumf %85, %86 : vector<16x64xf32>
    %cst_36 = arith.constant dense<0.000000e+00> : vector<16x32xf32>
    %88 = tpu.matmul %87, %10, %cst_36 {dimension_numbers = #tpu.dot_dimension_numbers<[1], [0], [0], [1], [0, 0, 1, 1], [], []>} : vector<16x64xf32>, vector<64x32xf32>, vector<16x32xf32> -> vector<16x32xf32>
    %89 = vector.extract_strided_slice %12 {offsets = [3, 0], sizes = [1, 32], strides = [1, 1]} : vector<8x128xf32> to vector<1x32xf32>
    %90 = vector.broadcast %89 : vector<1x32xf32> to vector<16x32xf32>
    %91 = arith.addf %88, %90 : vector<16x32xf32>
    %92 = arith.addf %81, %91 : vector<16x32xf32>
    %93 = vector.extract_strided_slice %12 {offsets = [6, 0], sizes = [1, 32], strides = [1, 1]} : vector<8x128xf32> to vector<1x32xf32>
    %94 = vector.extract_strided_slice %12 {offsets = [7, 0], sizes = [1, 32], strides = [1, 1]} : vector<8x128xf32> to vector<1x32xf32>
    %cst_37 = arith.constant dense<0.000000e+00> : vector<16xf32>
    %95 = vector.multi_reduction <add>, %92, %cst_37 [1] : vector<16x32xf32> to vector<16xf32>
    %96 = vector.shape_cast %95 : vector<16xf32> to vector<16x1xf32>
    %cst_38 = arith.constant 3.200000e+01 : f32
    %97 = vector.broadcast %cst_38 : f32 to vector<16x1xf32>
    %98 = arith.divf %96, %97 : vector<16x1xf32>
    %99 = vector.broadcast %98 : vector<16x1xf32> to vector<16x32xf32>
    %100 = arith.subf %92, %99 : vector<16x32xf32>
    %101 = arith.mulf %100, %100 : vector<16x32xf32>
    %cst_39 = arith.constant dense<0.000000e+00> : vector<16xf32>
    %102 = vector.multi_reduction <add>, %101, %cst_39 [1] : vector<16x32xf32> to vector<16xf32>
    %103 = vector.shape_cast %102 : vector<16xf32> to vector<16x1xf32>
    %cst_40 = arith.constant 3.200000e+01 : f32
    %104 = vector.broadcast %cst_40 : f32 to vector<16x1xf32>
    %105 = arith.divf %103, %104 : vector<16x1xf32>
    %106 = vector.broadcast %98 : vector<16x1xf32> to vector<16x32xf32>
    %107 = arith.subf %92, %106 : vector<16x32xf32>
    %cst_41 = arith.constant 9.99999974E-6 : f32
    %108 = vector.broadcast %cst_41 : f32 to vector<16x1xf32>
    %109 = arith.addf %105, %108 : vector<16x1xf32>
    %110 = math.rsqrt %109 : vector<16x1xf32>
    %111 = vector.broadcast %110 : vector<16x1xf32> to vector<16x32xf32>
    %112 = arith.mulf %107, %111 : vector<16x32xf32>
    %113 = vector.broadcast %93 : vector<1x32xf32> to vector<16x32xf32>
    %114 = arith.mulf %112, %113 : vector<16x32xf32>
    %115 = vector.broadcast %94 : vector<1x32xf32> to vector<16x32xf32>
    %116 = arith.addf %114, %115 : vector<16x32xf32>
    %c1 = arith.constant 1 : index
    %c0_42 = arith.constant 0 : index
    %c0_43 = arith.constant 0 : index
    %117 = vector.load %arg1[%c1, %c0_42, %c0_43] : memref<2x32x96xf32, #tpu.memory_space<vmem>>, vector<1x32x96xf32>
    %118 = vector.shape_cast %117 : vector<1x32x96xf32> to vector<32x96xf32>
    %c1_44 = arith.constant 1 : index
    %c0_45 = arith.constant 0 : index
    %c0_46 = arith.constant 0 : index
    %119 = vector.load %arg2[%c1_44, %c0_45, %c0_46] : memref<2x32x32xf32, #tpu.memory_space<vmem>>, vector<1x32x32xf32>
    %120 = vector.shape_cast %119 : vector<1x32x32xf32> to vector<32x32xf32>
    %c1_47 = arith.constant 1 : index
    %c0_48 = arith.constant 0 : index
    %c0_49 = arith.constant 0 : index
    %121 = vector.load %arg3[%c1_47, %c0_48, %c0_49] : memref<2x32x64xf32, #tpu.memory_space<vmem>>, vector<1x32x64xf32>
    %122 = vector.shape_cast %121 : vector<1x32x64xf32> to vector<32x64xf32>
    %c1_50 = arith.constant 1 : index
    %c0_51 = arith.constant 0 : index
    %c0_52 = arith.constant 0 : index
    %123 = vector.load %arg4[%c1_50, %c0_51, %c0_52] : memref<2x64x32xf32, #tpu.memory_space<vmem>>, vector<1x64x32xf32>
    %124 = vector.shape_cast %123 : vector<1x64x32xf32> to vector<64x32xf32>
    %c1_53 = arith.constant 1 : index
    %c0_54 = arith.constant 0 : index
    %c0_55 = arith.constant 0 : index
    %125 = vector.load %arg5[%c1_53, %c0_54, %c0_55] : memref<2x8x128xf32, #tpu.memory_space<vmem>>, vector<1x8x128xf32>
    %126 = vector.shape_cast %125 : vector<1x8x128xf32> to vector<8x128xf32>
    %cst_56 = arith.constant dense<0.000000e+00> : vector<16x96xf32>
    %127 = tpu.matmul %116, %118, %cst_56 {dimension_numbers = #tpu.dot_dimension_numbers<[1], [0], [0], [1], [0, 0, 1, 1], [], []>} : vector<16x32xf32>, vector<32x96xf32>, vector<16x96xf32> -> vector<16x96xf32>
    %128 = vector.extract_strided_slice %126 {offsets = [0, 0], sizes = [1, 96], strides = [1, 1]} : vector<8x128xf32> to vector<1x96xf32>
    %129 = vector.broadcast %128 : vector<1x96xf32> to vector<16x96xf32>
    %130 = arith.addf %127, %129 : vector<16x96xf32>
    %131 = vector.extract_strided_slice %130 {offsets = [0, 0], sizes = [16, 32], strides = [1, 1]} : vector<16x96xf32> to vector<16x32xf32>
    %132 = vector.extract_strided_slice %130 {offsets = [0, 32], sizes = [16, 32], strides = [1, 1]} : vector<16x96xf32> to vector<16x32xf32>
    %133 = vector.extract_strided_slice %130 {offsets = [0, 64], sizes = [16, 32], strides = [1, 1]} : vector<16x96xf32> to vector<16x32xf32>
    %134 = vector.extract_strided_slice %131 {offsets = [0, 0], sizes = [8, 32], strides = [1, 1]} : vector<16x32xf32> to vector<8x32xf32>
    %135 = vector.extract_strided_slice %132 {offsets = [0, 0], sizes = [8, 32], strides = [1, 1]} : vector<16x32xf32> to vector<8x32xf32>
    %136 = vector.extract_strided_slice %133 {offsets = [0, 0], sizes = [8, 32], strides = [1, 1]} : vector<16x32xf32> to vector<8x32xf32>
    %137 = tpu.concatenate %135, %135, %135, %135 in 0 : vector<8x32xf32>, vector<8x32xf32>, vector<8x32xf32>, vector<8x32xf32> -> vector<32x32xf32>
    %138 = arith.mulf %137, %1 : vector<32x32xf32>
    %139 = tpu.concatenate %136, %136, %136, %136 in 0 : vector<8x32xf32>, vector<8x32xf32>, vector<8x32xf32>, vector<8x32xf32> -> vector<32x32xf32>
    %140 = arith.mulf %139, %1 : vector<32x32xf32>
    "tpu.trace_start"() <{level = 10 : i32, message = "ld,cd->lc"}> : () -> ()
    %cst_57 = arith.constant dense<0.000000e+00> : vector<8x32xf32>
    %141 = tpu.matmul %134, %138, %cst_57 {dimension_numbers = #tpu.dot_dimension_numbers<[1], [1], [0], [0], [0, 0, 1, 0], [], []>} : vector<8x32xf32>, vector<32x32xf32>, vector<8x32xf32> -> vector<8x32xf32>
    "tpu.trace_stop"() : () -> ()
    %cst_58 = arith.constant dense<0xFF800000> : vector<8xf32>
    %142 = vector.multi_reduction <maximumf>, %141, %cst_58 [1] : vector<8x32xf32> to vector<8xf32>
    %143 = vector.shape_cast %142 : vector<8xf32> to vector<8x1xf32>
    %144 = vector.broadcast %143 : vector<8x1xf32> to vector<8x32xf32>
    %145 = arith.subf %141, %144 : vector<8x32xf32>
    %146 = math.exp %145 : vector<8x32xf32>
    %cst_59 = arith.constant dense<0.000000e+00> : vector<8x32xf32>
    %147 = tpu.matmul %146, %2, %cst_59 {dimension_numbers = #tpu.dot_dimension_numbers<[1], [0], [0], [1], [0, 0, 1, 1], [], []>} : vector<8x32xf32>, vector<32x32xf32>, vector<8x32xf32> -> vector<8x32xf32>
    %148 = arith.divf %146, %147 : vector<8x32xf32>
    %cst_60 = arith.constant dense<0.000000e+00> : vector<8x32xf32>
    %149 = tpu.matmul %148, %140, %cst_60 {dimension_numbers = #tpu.dot_dimension_numbers<[1], [0], [0], [1], [0, 0, 1, 1], [], []>} : vector<8x32xf32>, vector<32x32xf32>, vector<8x32xf32> -> vector<8x32xf32>
    %150 = vector.extract_strided_slice %131 {offsets = [8, 0], sizes = [8, 32], strides = [1, 1]} : vector<16x32xf32> to vector<8x32xf32>
    %151 = vector.extract_strided_slice %132 {offsets = [8, 0], sizes = [8, 32], strides = [1, 1]} : vector<16x32xf32> to vector<8x32xf32>
    %152 = vector.extract_strided_slice %133 {offsets = [8, 0], sizes = [8, 32], strides = [1, 1]} : vector<16x32xf32> to vector<8x32xf32>
    %153 = tpu.concatenate %151, %151, %151, %151 in 0 : vector<8x32xf32>, vector<8x32xf32>, vector<8x32xf32>, vector<8x32xf32> -> vector<32x32xf32>
    %154 = arith.mulf %153, %1 : vector<32x32xf32>
    %155 = tpu.concatenate %152, %152, %152, %152 in 0 : vector<8x32xf32>, vector<8x32xf32>, vector<8x32xf32>, vector<8x32xf32> -> vector<32x32xf32>
    %156 = arith.mulf %155, %1 : vector<32x32xf32>
    "tpu.trace_start"() <{level = 10 : i32, message = "ld,cd->lc"}> : () -> ()
    %cst_61 = arith.constant dense<0.000000e+00> : vector<8x32xf32>
    %157 = tpu.matmul %150, %154, %cst_61 {dimension_numbers = #tpu.dot_dimension_numbers<[1], [1], [0], [0], [0, 0, 1, 0], [], []>} : vector<8x32xf32>, vector<32x32xf32>, vector<8x32xf32> -> vector<8x32xf32>
    "tpu.trace_stop"() : () -> ()
    %cst_62 = arith.constant dense<0xFF800000> : vector<8xf32>
    %158 = vector.multi_reduction <maximumf>, %157, %cst_62 [1] : vector<8x32xf32> to vector<8xf32>
    %159 = vector.shape_cast %158 : vector<8xf32> to vector<8x1xf32>
    %160 = vector.broadcast %159 : vector<8x1xf32> to vector<8x32xf32>
    %161 = arith.subf %157, %160 : vector<8x32xf32>
    %162 = math.exp %161 : vector<8x32xf32>
    %cst_63 = arith.constant dense<0.000000e+00> : vector<8x32xf32>
    %163 = tpu.matmul %162, %2, %cst_63 {dimension_numbers = #tpu.dot_dimension_numbers<[1], [0], [0], [1], [0, 0, 1, 1], [], []>} : vector<8x32xf32>, vector<32x32xf32>, vector<8x32xf32> -> vector<8x32xf32>
    %164 = arith.divf %162, %163 : vector<8x32xf32>
    %cst_64 = arith.constant dense<0.000000e+00> : vector<8x32xf32>
    %165 = tpu.matmul %164, %156, %cst_64 {dimension_numbers = #tpu.dot_dimension_numbers<[1], [0], [0], [1], [0, 0, 1, 1], [], []>} : vector<8x32xf32>, vector<32x32xf32>, vector<8x32xf32> -> vector<8x32xf32>
    %166 = tpu.concatenate %149, %165 in 0 : vector<8x32xf32>, vector<8x32xf32> -> vector<16x32xf32>
    %cst_65 = arith.constant dense<0.000000e+00> : vector<16x32xf32>
    %167 = tpu.matmul %166, %120, %cst_65 {dimension_numbers = #tpu.dot_dimension_numbers<[1], [0], [0], [1], [0, 0, 1, 1], [], []>} : vector<16x32xf32>, vector<32x32xf32>, vector<16x32xf32> -> vector<16x32xf32>
    %168 = vector.extract_strided_slice %126 {offsets = [1, 0], sizes = [1, 32], strides = [1, 1]} : vector<8x128xf32> to vector<1x32xf32>
    %169 = vector.broadcast %168 : vector<1x32xf32> to vector<16x32xf32>
    %170 = arith.addf %167, %169 : vector<16x32xf32>
    %171 = arith.addf %116, %170 : vector<16x32xf32>
    %172 = vector.extract_strided_slice %126 {offsets = [4, 0], sizes = [1, 32], strides = [1, 1]} : vector<8x128xf32> to vector<1x32xf32>
    %173 = vector.extract_strided_slice %126 {offsets = [5, 0], sizes = [1, 32], strides = [1, 1]} : vector<8x128xf32> to vector<1x32xf32>
    %cst_66 = arith.constant dense<0.000000e+00> : vector<16xf32>
    %174 = vector.multi_reduction <add>, %171, %cst_66 [1] : vector<16x32xf32> to vector<16xf32>
    %175 = vector.shape_cast %174 : vector<16xf32> to vector<16x1xf32>
    %cst_67 = arith.constant 3.200000e+01 : f32
    %176 = vector.broadcast %cst_67 : f32 to vector<16x1xf32>
    %177 = arith.divf %175, %176 : vector<16x1xf32>
    %178 = vector.broadcast %177 : vector<16x1xf32> to vector<16x32xf32>
    %179 = arith.subf %171, %178 : vector<16x32xf32>
    %180 = arith.mulf %179, %179 : vector<16x32xf32>
    %cst_68 = arith.constant dense<0.000000e+00> : vector<16xf32>
    %181 = vector.multi_reduction <add>, %180, %cst_68 [1] : vector<16x32xf32> to vector<16xf32>
    %182 = vector.shape_cast %181 : vector<16xf32> to vector<16x1xf32>
    %cst_69 = arith.constant 3.200000e+01 : f32
    %183 = vector.broadcast %cst_69 : f32 to vector<16x1xf32>
    %184 = arith.divf %182, %183 : vector<16x1xf32>
    %185 = vector.broadcast %177 : vector<16x1xf32> to vector<16x32xf32>
    %186 = arith.subf %171, %185 : vector<16x32xf32>
    %cst_70 = arith.constant 9.99999974E-6 : f32
    %187 = vector.broadcast %cst_70 : f32 to vector<16x1xf32>
    %188 = arith.addf %184, %187 : vector<16x1xf32>
    %189 = math.rsqrt %188 : vector<16x1xf32>
    %190 = vector.broadcast %189 : vector<16x1xf32> to vector<16x32xf32>
    %191 = arith.mulf %186, %190 : vector<16x32xf32>
    %192 = vector.broadcast %172 : vector<1x32xf32> to vector<16x32xf32>
    %193 = arith.mulf %191, %192 : vector<16x32xf32>
    %194 = vector.broadcast %173 : vector<1x32xf32> to vector<16x32xf32>
    %195 = arith.addf %193, %194 : vector<16x32xf32>
    %cst_71 = arith.constant dense<0.000000e+00> : vector<16x64xf32>
    %196 = tpu.matmul %195, %122, %cst_71 {dimension_numbers = #tpu.dot_dimension_numbers<[1], [0], [0], [1], [0, 0, 1, 1], [], []>} : vector<16x32xf32>, vector<32x64xf32>, vector<16x64xf32> -> vector<16x64xf32>
    %197 = vector.extract_strided_slice %126 {offsets = [2, 0], sizes = [1, 64], strides = [1, 1]} : vector<8x128xf32> to vector<1x64xf32>
    %198 = vector.broadcast %197 : vector<1x64xf32> to vector<16x64xf32>
    %199 = arith.addf %196, %198 : vector<16x64xf32>
    %cst_72 = arith.constant 0.000000e+00 : f32
    %200 = vector.broadcast %cst_72 : f32 to vector<16x64xf32>
    %201 = arith.maximumf %199, %200 : vector<16x64xf32>
    %cst_73 = arith.constant dense<0.000000e+00> : vector<16x32xf32>
    %202 = tpu.matmul %201, %124, %cst_73 {dimension_numbers = #tpu.dot_dimension_numbers<[1], [0], [0], [1], [0, 0, 1, 1], [], []>} : vector<16x64xf32>, vector<64x32xf32>, vector<16x32xf32> -> vector<16x32xf32>
    %203 = vector.extract_strided_slice %126 {offsets = [3, 0], sizes = [1, 32], strides = [1, 1]} : vector<8x128xf32> to vector<1x32xf32>
    %204 = vector.broadcast %203 : vector<1x32xf32> to vector<16x32xf32>
    %205 = arith.addf %202, %204 : vector<16x32xf32>
    %206 = arith.addf %195, %205 : vector<16x32xf32>
    %207 = vector.extract_strided_slice %126 {offsets = [6, 0], sizes = [1, 32], strides = [1, 1]} : vector<8x128xf32> to vector<1x32xf32>
    %208 = vector.extract_strided_slice %126 {offsets = [7, 0], sizes = [1, 32], strides = [1, 1]} : vector<8x128xf32> to vector<1x32xf32>
    %cst_74 = arith.constant dense<0.000000e+00> : vector<16xf32>
    %209 = vector.multi_reduction <add>, %206, %cst_74 [1] : vector<16x32xf32> to vector<16xf32>
    %210 = vector.shape_cast %209 : vector<16xf32> to vector<16x1xf32>
    %cst_75 = arith.constant 3.200000e+01 : f32
    %211 = vector.broadcast %cst_75 : f32 to vector<16x1xf32>
    %212 = arith.divf %210, %211 : vector<16x1xf32>
    %213 = vector.broadcast %212 : vector<16x1xf32> to vector<16x32xf32>
    %214 = arith.subf %206, %213 : vector<16x32xf32>
    %215 = arith.mulf %214, %214 : vector<16x32xf32>
    %cst_76 = arith.constant dense<0.000000e+00> : vector<16xf32>
    %216 = vector.multi_reduction <add>, %215, %cst_76 [1] : vector<16x32xf32> to vector<16xf32>
    %217 = vector.shape_cast %216 : vector<16xf32> to vector<16x1xf32>
    %cst_77 = arith.constant 3.200000e+01 : f32
    %218 = vector.broadcast %cst_77 : f32 to vector<16x1xf32>
    %219 = arith.divf %217, %218 : vector<16x1xf32>
    %220 = vector.broadcast %212 : vector<16x1xf32> to vector<16x32xf32>
    %221 = arith.subf %206, %220 : vector<16x32xf32>
    %cst_78 = arith.constant 9.99999974E-6 : f32
    %222 = vector.broadcast %cst_78 : f32 to vector<16x1xf32>
    %223 = arith.addf %219, %222 : vector<16x1xf32>
    %224 = math.rsqrt %223 : vector<16x1xf32>
    %225 = vector.broadcast %224 : vector<16x1xf32> to vector<16x32xf32>
    %226 = arith.mulf %221, %225 : vector<16x32xf32>
    %227 = vector.broadcast %207 : vector<1x32xf32> to vector<16x32xf32>
    %228 = arith.mulf %226, %227 : vector<16x32xf32>
    %229 = vector.broadcast %208 : vector<1x32xf32> to vector<16x32xf32>
    %230 = arith.addf %228, %229 : vector<16x32xf32>
    %c0_79 = arith.constant 0 : index
    %c0_80 = arith.constant 0 : index
    %231 = vector.load %arg6[%c0_79, %c0_80] : memref<8x128xf32, #tpu.memory_space<vmem>>, vector<1x32xf32>
    %c1_81 = arith.constant 1 : index
    %c0_82 = arith.constant 0 : index
    %232 = vector.load %arg6[%c1_81, %c0_82] : memref<8x128xf32, #tpu.memory_space<vmem>>, vector<1x32xf32>
    %cst_83 = arith.constant dense<0.000000e+00> : vector<16xf32>
    %233 = vector.multi_reduction <add>, %230, %cst_83 [1] : vector<16x32xf32> to vector<16xf32>
    %234 = vector.shape_cast %233 : vector<16xf32> to vector<16x1xf32>
    %cst_84 = arith.constant 3.200000e+01 : f32
    %235 = vector.broadcast %cst_84 : f32 to vector<16x1xf32>
    %236 = arith.divf %234, %235 : vector<16x1xf32>
    %237 = vector.broadcast %236 : vector<16x1xf32> to vector<16x32xf32>
    %238 = arith.subf %230, %237 : vector<16x32xf32>
    %239 = arith.mulf %238, %238 : vector<16x32xf32>
    %cst_85 = arith.constant dense<0.000000e+00> : vector<16xf32>
    %240 = vector.multi_reduction <add>, %239, %cst_85 [1] : vector<16x32xf32> to vector<16xf32>
    %241 = vector.shape_cast %240 : vector<16xf32> to vector<16x1xf32>
    %cst_86 = arith.constant 3.200000e+01 : f32
    %242 = vector.broadcast %cst_86 : f32 to vector<16x1xf32>
    %243 = arith.divf %241, %242 : vector<16x1xf32>
    %244 = vector.broadcast %236 : vector<16x1xf32> to vector<16x32xf32>
    %245 = arith.subf %230, %244 : vector<16x32xf32>
    %cst_87 = arith.constant 9.99999974E-6 : f32
    %246 = vector.broadcast %cst_87 : f32 to vector<16x1xf32>
    %247 = arith.addf %243, %246 : vector<16x1xf32>
    %248 = math.rsqrt %247 : vector<16x1xf32>
    %249 = vector.broadcast %248 : vector<16x1xf32> to vector<16x32xf32>
    %250 = arith.mulf %245, %249 : vector<16x32xf32>
    %251 = vector.broadcast %231 : vector<1x32xf32> to vector<16x32xf32>
    %252 = arith.mulf %250, %251 : vector<16x32xf32>
    %253 = vector.broadcast %232 : vector<1x32xf32> to vector<16x32xf32>
    %254 = arith.addf %252, %253 : vector<16x32xf32>
    %255 = vector.extract_strided_slice %254 {offsets = [0, 0], sizes = [8, 32], strides = [1, 1]} : vector<16x32xf32> to vector<8x32xf32>
    %256 = vector.extract_strided_slice %254 {offsets = [8, 0], sizes = [8, 32], strides = [1, 1]} : vector<16x32xf32> to vector<8x32xf32>
    %257 = tpu.concatenate %255, %256 in 1 : vector<8x32xf32>, vector<8x32xf32> -> vector<8x64xf32>
    %c0_88 = arith.constant 0 : index
    %c0_89 = arith.constant 0 : index
    %258 = vector.load %arg9[%c0_88, %c0_89] : memref<8x64xf32, #tpu.memory_space<vmem>>, vector<8x64xf32>
    tpu.vector_store %arg9[%c0_88, %c0_89], %257 {strides = array<i32>} : memref<8x64xf32, #tpu.memory_space<vmem>>, vector<8x64xf32>,
    %259 = tpu.concatenate %34, %50, %148, %164 in 1 : vector<8x32xf32>, vector<8x32xf32>, vector<8x32xf32>, vector<8x32xf32> -> vector<8x128xf32>
    %c0_90 = arith.constant 0 : index
    %c0_91 = arith.constant 0 : index
    %260 = vector.load %arg10[%c0_90, %c0_91] : memref<8x128xf32, #tpu.memory_space<vmem>>, vector<8x128xf32>
    tpu.vector_store %arg10[%c0_90, %c0_91], %259 {strides = array<i32>} : memref<8x128xf32, #tpu.memory_space<vmem>>, vector<8x128xf32>,
    return
  }
}

</mosaic_0001>

<llo_original>
// kernel: tpu_custom_call.1
$region0: #{tpu_custom_call.1}
  #allocation0 [shape = 'u32[]', space=smem, size = 0x4, offset = 0x4, fixed_abs, tag = 'smem constant byte address 0x4 - core index']
  #allocation1 [shape = 'u32[144,128]{1,0:T(1,128)}', space=vmem, size = 0x12000, scoped, tag = 'internal scratch']
  %s0 = inlined_call_operand.hbm [shape: f32[16,32], index: 0, kind: input, shape index: {}]
  %s1 = inlined_call_operand.vmem [shape: f32[2,32,96], index: 1, kind: input, shape index: {}]
  %s2 = inlined_call_operand.vmem [shape: f32[2,32,32], index: 2, kind: input, shape index: {}]
  %s3 = inlined_call_operand.vmem [shape: f32[2,32,64], index: 3, kind: input, shape index: {}]
  %s4 = inlined_call_operand.vmem [shape: f32[2,64,32], index: 4, kind: input, shape index: {}]
  %s5 = inlined_call_operand.vmem [shape: f32[2,8,128], index: 5, kind: input, shape index: {}]
  %s6 = inlined_call_operand.hbm [shape: f32[8,128], index: 6, kind: input, shape index: {}]
  %s7 = inlined_call_operand.hbm [shape: f32[32,32], index: 7, kind: input, shape index: {}]
  %s8 = inlined_call_operand.hbm [shape: f32[32,32], index: 8, kind: input, shape index: {}]
  %s9 = inlined_call_operand.hbm [shape: f32[8,64], index: 9, kind: output, shape index: {0}]
  %s10 = inlined_call_operand.hbm [shape: f32[8,128], index: 10, kind: output, shape index: {1}]
  %11 = xla_tuple %s9, %s10
  %s12 = sld [smem:[#allocation0]]
  $region70: #{tpu_custom_call.1} parent=0
    _
  %s14 = ssub.s32 1, %s12
  %s15 = scalar_select 0, %s14, %s12
  $region1: #{tpu_custom_call.1} parent=0
    #allocation2 [shape = 'u8[8192]{0}', space=vmem, size = 0x2000, scoped, tag = 'input window, operand 0, single buffered']
    #allocation3 [shape = 's32[1]{0}', space=sflag, size = 0x4, scoped, tag = 'scoped memory for tpu_custom_call.1']
    #allocation4 [shape = 's32[1]{0}', space=sflag, size = 0x4, scoped, tag = 'scoped memory for tpu_custom_call.1']
    #allocation5 [shape = 'u8[4096]{0}', space=vmem, size = 0x1000, scoped, tag = 'input window, operand 6, single buffered']
    #allocation6 [shape = 's32[1]{0}', space=sflag, size = 0x4, scoped, tag = 'scoped memory for tpu_custom_call.1']
    #allocation7 [shape = 'u8[16384]{0}', space=vmem, size = 0x4000, scoped, tag = 'input window, operand 7, single buffered']
    #allocation8 [shape = 'u8[16384]{0}', space=vmem, size = 0x4000, scoped, tag = 'input window, operand 8, single buffered']
    #allocation9 [shape = 's32[1]{0}', space=sflag, size = 0x4, scoped, tag = 'scoped memory for tpu_custom_call.1']
    #allocation10 [shape = 'u8[4096]{0}', space=vmem, size = 0x1000, scoped, tag = 'output window, operand 0, single buffered']
    #allocation11 [shape = 'u8[4096]{0}', space=vmem, size = 0x1000, scoped, tag = 'output window, operand 1, single buffered']
    #allocation12 [shape = 's32[1]{0}', space=sflag, size = 0x4, scoped, tag = 'scoped memory for tpu_custom_call.1']
    %16 = vsyncpa [#allocation3], 0
    %17 = vsyncpa [#allocation6], 0
    %18 = vsyncpa [#allocation9], 0
    %19 = vsyncpa [#allocation4], 0
    %20 = vsyncpa [#allocation12], 0
    // Predicated region
    $region2: #{tpu_custom_call.1} parent=1 // pred_check
      _
    $region3: #{tpu_custom_call.1} parent=1 // pred_check_branch
      %22 = sbr.rel (0) target = $region5
    $region4: #{tpu_custom_call.1} parent=1 // pred_region
      %s24 = ssub.s32 256, 256
      %25 = vsyncadd [#allocation3], %s24
      %s26 = sshll.u32 [#allocation2], 4
      %s27 = int_to_ptr.vmem [resolvable:$true] %s26
      %32 = dma.hbm_to_vmem [thread:$0]  %s0, 256, %s27, [#allocation3], 128, 128, 8
    $region5: #{tpu_custom_call.1} parent=1 // pred_fallthru
      _
    // Predicated region
    $region6: #{tpu_custom_call.1} parent=1 // pred_check
      _
    $region7: #{tpu_custom_call.1} parent=1 // pred_check_branch
      %34 = sbr.rel (0) target = $region9
    $region8: #{tpu_custom_call.1} parent=1 // pred_region
      _
    $region9: #{tpu_custom_call.1} parent=1 // pred_fallthru
      _
    // Predicated region
    $region10: #{tpu_custom_call.1} parent=1 // pred_check
      _
    $region11: #{tpu_custom_call.1} parent=1 // pred_check_branch
      %36 = sbr.rel (0) target = $region13
    $region12: #{tpu_custom_call.1} parent=1 // pred_region
      _
    $region13: #{tpu_custom_call.1} parent=1 // pred_fallthru
      _
    // Predicated region
    $region14: #{tpu_custom_call.1} parent=1 // pred_check
      _
    $region15: #{tpu_custom_call.1} parent=1 // pred_check_branch
      %38 = sbr.rel (0) target = $region17
    $region16: #{tpu_custom_call.1} parent=1 // pred_region
      _
    $region17: #{tpu_custom_call.1} parent=1 // pred_fallthru
      _
    // Predicated region
    $region18: #{tpu_custom_call.1} parent=1 // pred_check
      _
    $region19: #{tpu_custom_call.1} parent=1 // pred_check_branch
      %40 = sbr.rel (0) target = $region21
    $region20: #{tpu_custom_call.1} parent=1 // pred_region
      _
    $region21: #{tpu_custom_call.1} parent=1 // pred_fallthru
      _
    // Predicated region
    $region22: #{tpu_custom_call.1} parent=1 // pred_check
      _
    $region23: #{tpu_custom_call.1} parent=1 // pred_check_branch
      %42 = sbr.rel (0) target = $region25
    $region24: #{tpu_custom_call.1} parent=1 // pred_region
      _
    $region25: #{tpu_custom_call.1} parent=1 // pred_fallthru
      _
    // Predicated region
    $region26: #{tpu_custom_call.1} parent=1 // pred_check
      _
    $region27: #{tpu_custom_call.1} parent=1 // pred_check_branch
      %44 = sbr.rel (0) target = $region29
    $region28: #{tpu_custom_call.1} parent=1 // pred_region
      %s46 = ssub.s32 128, 128
      %47 = vsyncadd [#allocation6], %s46
      %s49 = sshll.u32 [#allocation5], 4
      %s50 = int_to_ptr.vmem [resolvable:$true] %s49
      %52 = dma.hbm_to_vmem [thread:$0]  %s6, 128, %s50, [#allocation6]
    $region29: #{tpu_custom_call.1} parent=1 // pred_fallthru
      _
    // Predicated region
    $region30: #{tpu_custom_call.1} parent=1 // pred_check
      _
    $region31: #{tpu_custom_call.1} parent=1 // pred_check_branch
      %54 = sbr.rel (0) target = $region33
    $region32: #{tpu_custom_call.1} parent=1 // pred_region
      %s56 = ssub.s32 512, 512
      %57 = vsyncadd [#allocation6], %s56
      %s58 = sshll.u32 [#allocation7], 4
      %s59 = int_to_ptr.vmem [resolvable:$true] %s58
      %64 = dma.hbm_to_vmem [thread:$0]  %s7, 512, %s59, [#allocation6], 128, 128, 8
    $region33: #{tpu_custom_call.1} parent=1 // pred_fallthru
      _
    // Predicated region
    $region34: #{tpu_custom_call.1} parent=1 // pred_check
      _
    $region35: #{tpu_custom_call.1} parent=1 // pred_check_branch
      %66 = sbr.rel (0) target = $region37
    $region36: #{tpu_custom_call.1} parent=1 // pred_region
      %s68 = ssub.s32 512, 512
      %69 = vsyncadd [#allocation9], %s68
      %s70 = sshll.u32 [#allocation8], 4
      %s71 = int_to_ptr.vmem [resolvable:$true] %s70
      %76 = dma.hbm_to_vmem [thread:$0]  %s8, 512, %s71, [#allocation9], 128, 128, 8
    $region37: #{tpu_custom_call.1} parent=1 // pred_fallthru
      _
    // Predicated region
    $region38: #{tpu_custom_call.1} parent=1 // pred_check
      _
    $region39: #{tpu_custom_call.1} parent=1 // pred_check_branch
      %78 = sbr.rel (0) target = $region41
    $region40: #{tpu_custom_call.1} parent=1 // pred_region
      %79 = dma.done [#allocation3], 256
    $region41: #{tpu_custom_call.1} parent=1 // pred_fallthru
      _
    // Predicated region
    $region42: #{tpu_custom_call.1} parent=1 // pred_check
      _
    $region43: #{tpu_custom_call.1} parent=1 // pred_check_branch
      %81 = sbr.rel (0) target = $region45
    $region44: #{tpu_custom_call.1} parent=1 // pred_region
      %82 = dma.done [#allocation6], 128
    $region45: #{tpu_custom_call.1} parent=1 // pred_fallthru
      _
    // Predicated region
    $region46: #{tpu_custom_call.1} parent=1 // pred_check
      _
    $region47: #{tpu_custom_call.1} parent=1 // pred_check_branch
      %84 = sbr.rel (0) target = $region49
    $region48: #{tpu_custom_call.1} parent=1 // pred_region
      %85 = dma.done [#allocation6], 512
    $region49: #{tpu_custom_call.1} parent=1 // pred_fallthru
      _
    // Predicated region
    $region50: #{tpu_custom_call.1} parent=1 // pred_check
      _
    $region51: #{tpu_custom_call.1} parent=1 // pred_check_branch
      %87 = sbr.rel (0) target = $region53
    $region52: #{tpu_custom_call.1} parent=1 // pred_region
      %88 = dma.done [#allocation9], 512
    $region53: #{tpu_custom_call.1} parent=1 // pred_fallthru
      _
    %v89 = vld [vmem:[#allocation2] sm:$0xff]
    %v90 = vld [vmem:[#allocation2 + $0x8] sm:$0xff]
    %v91 = vld [vmem:[#allocation7] sm:$0xff]
    %v92 = vld [vmem:[#allocation7 + $0x8] sm:$0xff]
    %v93 = vld [vmem:[#allocation7 + $0x10] sm:$0xff]
    %v94 = vld [vmem:[#allocation7 + $0x18] sm:$0xff]
    %v95 = vld [vmem:[#allocation8] sm:$0xff]
    %v96 = vld [vmem:[#allocation8 + $0x8] sm:$0xff]
    %v97 = vld [vmem:[#allocation8 + $0x10] sm:$0xff]
    %v98 = vld [vmem:[#allocation8 + $0x18] sm:$0xff]
    %v99 = vld [vmem:[%s1] sm:$0xff]
    %v100 = vld [vmem:[%s1 + $0x8] sm:$0xff]
    %v101 = vld [vmem:[%s1 + $0x10] sm:$0xff]
    %v102 = vld [vmem:[%s1 + $0x18] sm:$0xff]
    %v103 = vld [vmem:[%s2] sm:$0xff]
    %v104 = vld [vmem:[%s2 + $0x8] sm:$0xff]
    %v105 = vld [vmem:[%s2 + $0x10] sm:$0xff]
    %v106 = vld [vmem:[%s2 + $0x18] sm:$0xff]
    %v107 = vld [vmem:[%s3] sm:$0xff]
    %v108 = vld [vmem:[%s3 + $0x8] sm:$0xff]
    %v109 = vld [vmem:[%s3 + $0x10] sm:$0xff]
    %v110 = vld [vmem:[%s3 + $0x18] sm:$0xff]
    %v111 = vld [vmem:[%s4] sm:$0xff]
    %v112 = vld [vmem:[%s4 + $0x8] sm:$0xff]
    %v113 = vld [vmem:[%s4 + $0x10] sm:$0xff]
    %v114 = vld [vmem:[%s4 + $0x18] sm:$0xff]
    %v115 = vld [vmem:[%s4 + $0x20] sm:$0xff]
    %v116 = vld [vmem:[%s4 + $0x28] sm:$0xff]
    %v117 = vld [vmem:[%s4 + $0x30] sm:$0xff]
    %v118 = vld [vmem:[%s4 + $0x38] sm:$0xff]
    %v119 = vld [vmem:[%s5] sm:$0xff]
    %v120 = vlaneseq
    %v121 = vshrl.u32 %v120, 7
    %v122 = vsub.s32 0, %v121
    %v123 = vrot.slane %v119, %v122
    %vm124 = vcmask 261120
    %v126 = vsel %vm124, %v89, 0
    %v129 = vsel %vm124, %v90, 0
    %131 = vmatprep.subr.mxu0 0.0
    %132 = vmatpush1.msra.mxu0 %v99
    %133 = vmatprep.subr.mxu0 0.0
    %134 = vmatpush1.msra.mxu0 %v100
    %135 = vmatprep.subr.mxu0 0.0
    %136 = vmatpush1.msra.mxu0 %v101
    %137 = vmatprep.subr.mxu0 0.0
    %138 = vmatpush1.msra.mxu0 %v102
    %139 = vmatprep.subr.mxu0 0.0
    %140 = vmatpush1.msra.mxu0 0.0
    %141 = vmatprep.subr.mxu0 0.0
    %142 = vmatpush1.msra.mxu0 0.0
    %143 = vmatprep.subr.mxu0 0.0
    %144 = vmatpush1.msra.mxu0 0.0
    %145 = vmatprep.subr.mxu0 0.0
    %146 = vmatpush1.msra.mxu0 0.0
    %147 = vmatprep.subr.mxu0 0.0
    %148 = vmatpush1.msra.mxu0 0.0
    %149 = vmatprep.subr.mxu0 0.0
    %150 = vmatpush1.msra.mxu0 0.0
    %151 = vmatprep.subr.mxu0 0.0
    %152 = vmatpush1.msra.mxu0 0.0
    %153 = vmatprep.subr.mxu0 0.0
    %154 = vmatpush1.msra.mxu0 0.0
    %155 = vmatprep.subr.mxu0 0.0
    %156 = vmatpush1.msra.mxu0 0.0
    %157 = vmatprep.subr.mxu0 0.0
    %158 = vmatpush1.msra.mxu0 0.0
    %159 = vmatprep.subr.mxu0 0.0
    %160 = vmatpush1.msra.mxu0 0.0
    %161 = vmatprep.subr.mxu0 0.0
    %162 = vmatpush1.msra.mxu0 0.0
    %163 = vmatprep.subr.mxu0 0.0
    %164 = vmatpush1.msra.mxu0 0.0
    %165 = vmatprep.subr.mxu0 0.0
    %166 = vmatpush1.msra.mxu0 0.0
    %167 = vmatprep.subr.mxu0 0.0
    %168 = vmatpush1.msra.mxu0 0.0
    %169 = vmatprep.subr.mxu0 0.0
    %170 = vmatpush1.msra.mxu0 0.0
    %171 = vmatprep.subr.mxu0 0.0
    %172 = vmatpush1.msra.mxu0 0.0
    %173 = vmatprep.subr.mxu0 0.0
    %174 = vmatpush1.msra.mxu0 0.0
    %175 = vmatprep.subr.mxu0 0.0
    %176 = vmatpush1.msra.mxu0 0.0
    %177 = vmatprep.subr.mxu0 0.0
    %178 = vmatpush1.msra.mxu0 0.0
    %179 = vmatprep.subr.mxu0 0.0
    %180 = vmatpush1.msra.mxu0 0.0
    %181 = vmatprep.subr.mxu0 0.0
    %182 = vmatpush1.msra.mxu0 0.0
    %183 = vmatprep.subr.mxu0 0.0
    %184 = vmatpush1.msra.mxu0 0.0
    %185 = vmatprep.subr.mxu0 0.0
    %186 = vmatpush1.msra.mxu0 0.0
    %187 = vmatprep.subr.mxu0 0.0
    %188 = vmatpush1.msra.mxu0 0.0
    %189 = vmatprep.subr.mxu0 0.0
    %190 = vmatpush1.msra.mxu0 0.0
    %191 = vmatprep.subr.mxu0 0.0
    %192 = vmatpush1.msra.mxu0 0.0
    %193 = vmatprep.subr.mxu0 0.0
    %194 = vmatpush1.msra.mxu0 0.0
    %195 = vmatprep.mubr.f32.mxu0 0.0
    %196 = vmatmul.mubr.f32.gmra.mrb[0].mxu0 %v126
    %v197 = vpop.f32.mrb[0].mxu0
    %v198 = vadd.f32 %v123, %v197
    %v199 = vpop.f32.mrb[0].mxu0
    %200 = vmatprep.mubr.f32.mxu0 0.0
    %201 = vmatmul.mubr.f32.gmra.mrb[0].mxu0 %v129
    %v202 = vpop.f32.mrb[0].mxu0
    %v203 = vadd.f32 %v123, %v202
    %v204 = vpop.f32.mrb[0].mxu0
    %205 = vdwg.mxu0
    %210 = vrot.lane.b32.xlu0 %v91, 32
    %v211 = vpop.permute.xlu0 %210
    %212 = vrot.lane.b32.xlu0 %v92, 32
    %v213 = vpop.permute.xlu0 %212
    %214 = vrot.lane.b32.xlu0 %v93, 32
    %v215 = vpop.permute.xlu0 %214
    %216 = vrot.lane.b32.xlu0 %v94, 32
    %v217 = vpop.permute.xlu0 %216
    %v222 = vmul.f32 %v198, %v211
    %v223 = vmul.f32 %v198, %v213
    %v224 = vmul.f32 %v198, %v215
    %v225 = vmul.f32 %v198, %v217
    %226 = vrot.lane.b32.xlu0 %v91, 64
    %v227 = vpop.permute.xlu0 %226
    %228 = vrot.lane.b32.xlu0 %v92, 64
    %v229 = vpop.permute.xlu0 %228
    %230 = vrot.lane.b32.xlu0 %v93, 64
    %v231 = vpop.permute.xlu0 %230
    %232 = vrot.lane.b32.xlu0 %v94, 64
    %v233 = vpop.permute.xlu0 %232
    %v238 = vmul.f32 %v198, %v227
    %v239 = vmul.f32 %v198, %v229
    %v240 = vmul.f32 %v198, %v231
    %v241 = vmul.f32 %v198, %v233
    %246 = vrot.lane.b32.xlu0 %v222, 96
    %v247 = vpop.permute.xlu0 %246
    %248 = vrot.lane.b32.xlu0 %v223, 96
    %v249 = vpop.permute.xlu0 %248
    %250 = vrot.lane.b32.xlu0 %v224, 96
    %v251 = vpop.permute.xlu0 %250
    %252 = vrot.lane.b32.xlu0 %v225, 96
    %v253 = vpop.permute.xlu0 %252
    %v255 = vsel %vm124, %v198, 0
    %v257 = vsel %vm124, %v247, 0
    %v259 = vsel %vm124, %v249, 0
    %v261 = vsel %vm124, %v251, 0
    %v263 = vsel %vm124, %v253, 0
    %265 = vmatprep.subr.mxu0 0.0
    %266 = vmatpush1.xpose.msra.mxu0 %v257
    %267 = vmatprep.subr.mxu0 0.0
    %268 = vmatpush1.xpose.msra.mxu0 %v259
    %269 = vmatprep.subr.mxu0 0.0
    %270 = vmatpush1.xpose.msra.mxu0 %v261
    %271 = vmatprep.subr.mxu0 0.0
    %272 = vmatpush1.xpose.msra.mxu0 %v263
    %273 = vmatprep.subr.mxu0 0.0
    %274 = vmatpush1.xpose.msra.mxu0 0.0
    %275 = vmatprep.subr.mxu0 0.0
    %276 = vmatpush1.xpose.msra.mxu0 0.0
    %277 = vmatprep.subr.mxu0 0.0
    %278 = vmatpush1.xpose.msra.mxu0 0.0
    %279 = vmatprep.subr.mxu0 0.0
    %280 = vmatpush1.xpose.msra.mxu0 0.0
    %281 = vmatprep.subr.mxu0 0.0
    %282 = vmatpush1.xpose.msra.mxu0 0.0
    %283 = vmatprep.subr.mxu0 0.0
    %284 = vmatpush1.xpose.msra.mxu0 0.0
    %285 = vmatprep.subr.mxu0 0.0
    %286 = vmatpush1.xpose.msra.mxu0 0.0
    %287 = vmatprep.subr.mxu0 0.0
    %288 = vmatpush1.xpose.msra.mxu0 0.0
    %289 = vmatprep.subr.mxu0 0.0
    %290 = vmatpush1.xpose.msra.mxu0 0.0
    %291 = vmatprep.subr.mxu0 0.0
    %292 = vmatpush1.xpose.msra.mxu0 0.0
    %293 = vmatprep.subr.mxu0 0.0
    %294 = vmatpush1.xpose.msra.mxu0 0.0
    %295 = vmatprep.subr.mxu0 0.0
    %296 = vmatpush1.xpose.msra.mxu0 0.0
    %297 = vmatprep.subr.mxu0 0.0
    %298 = vmatpush1.xpose.msra.mxu0 0.0
    %299 = vmatprep.subr.mxu0 0.0
    %300 = vmatpush1.xpose.msra.mxu0 0.0
    %301 = vmatprep.subr.mxu0 0.0
    %302 = vmatpush1.xpose.msra.mxu0 0.0
    %303 = vmatprep.subr.mxu0 0.0
    %304 = vmatpush1.xpose.msra.mxu0 0.0
    %305 = vmatprep.subr.mxu0 0.0
    %306 = vmatpush1.xpose.msra.mxu0 0.0
    %307 = vmatprep.subr.mxu0 0.0
    %308 = vmatpush1.xpose.msra.mxu0 0.0
    %309 = vmatprep.subr.mxu0 0.0
    %310 = vmatpush1.xpose.msra.mxu0 0.0
    %311 = vmatprep.subr.mxu0 0.0
    %312 = vmatpush1.xpose.msra.mxu0 0.0
    %313 = vmatprep.subr.mxu0 0.0
    %314 = vmatpush1.xpose.msra.mxu0 0.0
    %315 = vmatprep.subr.mxu0 0.0
    %316 = vmatpush1.xpose.msra.mxu0 0.0
    %317 = vmatprep.subr.mxu0 0.0
    %318 = vmatpush1.xpose.msra.mxu0 0.0
    %319 = vmatprep.subr.mxu0 0.0
    %320 = vmatpush1.xpose.msra.mxu0 0.0
    %321 = vmatprep.subr.mxu0 0.0
    %322 = vmatpush1.xpose.msra.mxu0 0.0
    %323 = vmatprep.subr.mxu0 0.0
    %324 = vmatpush1.xpose.msra.mxu0 0.0
    %325 = vmatprep.subr.mxu0 0.0
    %326 = vmatpush1.xpose.msra.mxu0 0.0
    %327 = vmatprep.subr.mxu0 0.0
    %328 = vmatpush1.xpose.msra.mxu0 0.0
    %329 = vmatprep.mubr.f32.mxu0 0.0
    %330 = vmatmul.mubr.f32.gmra.mrb[0].mxu0 %v255
    %v331 = vpop.f32.mrb[0].mxu0
    %v332 = vadd.f32 0.0, %v331
    %v333 = vpop.f32.mrb[0].mxu0
    %334 = vdwg.mxu0
    %v335 = vsel %vm124, %v332, -inf
    %336 = vmax.xlane.f32.xlu0 %v335
    %v337 = vpop.xlane.xlu0 %336
    %v338 = vsub.f32 %v332, %v337
    %v339 = vmul.f32 %v338, 1.442695
    %v340 = vpow.pop %v339
    %v342 = vsel %vm124, %v340, 0
    %344 = vmatprep.subr.mxu0 0.0
    %345 = vmatpush1.msra.mxu0 %v95
    %346 = vmatprep.subr.mxu0 0.0
    %347 = vmatpush1.msra.mxu0 %v96
    %348 = vmatprep.subr.mxu0 0.0
    %349 = vmatpush1.msra.mxu0 %v97
    %350 = vmatprep.subr.mxu0 0.0
    %351 = vmatpush1.msra.mxu0 %v98
    %352 = vmatprep.subr.mxu0 0.0
    %353 = vmatpush1.msra.mxu0 0.0
    %354 = vmatprep.subr.mxu0 0.0
    %355 = vmatpush1.msra.mxu0 0.0
    %356 = vmatprep.subr.mxu0 0.0
    %357 = vmatpush1.msra.mxu0 0.0
    %358 = vmatprep.subr.mxu0 0.0
    %359 = vmatpush1.msra.mxu0 0.0
    %360 = vmatprep.subr.mxu0 0.0
    %361 = vmatpush1.msra.mxu0 0.0
    %362 = vmatprep.subr.mxu0 0.0
    %363 = vmatpush1.msra.mxu0 0.0
    %364 = vmatprep.subr.mxu0 0.0
    %365 = vmatpush1.msra.mxu0 0.0
    %366 = vmatprep.subr.mxu0 0.0
    %367 = vmatpush1.msra.mxu0 0.0
    %368 = vmatprep.subr.mxu0 0.0
    %369 = vmatpush1.msra.mxu0 0.0
    %370 = vmatprep.subr.mxu0 0.0
    %371 = vmatpush1.msra.mxu0 0.0
    %372 = vmatprep.subr.mxu0 0.0
    %373 = vmatpush1.msra.mxu0 0.0
    %374 = vmatprep.subr.mxu0 0.0
    %375 = vmatpush1.msra.mxu0 0.0
    %376 = vmatprep.subr.mxu0 0.0
    %377 = vmatpush1.msra.mxu0 0.0
    %378 = vmatprep.subr.mxu0 0.0
    %379 = vmatpush1.msra.mxu0 0.0
    %380 = vmatprep.subr.mxu0 0.0
    %381 = vmatpush1.msra.mxu0 0.0
    %382 = vmatprep.subr.mxu0 0.0
    %383 = vmatpush1.msra.mxu0 0.0
    %384 = vmatprep.subr.mxu0 0.0
    %385 = vmatpush1.msra.mxu0 0.0
    %386 = vmatprep.subr.mxu0 0.0
    %387 = vmatpush1.msra.mxu0 0.0
    %388 = vmatprep.subr.mxu0 0.0
    %389 = vmatpush1.msra.mxu0 0.0
    %390 = vmatprep.subr.mxu0 0.0
    %391 = vmatpush1.msra.mxu0 0.0
    %392 = vmatprep.subr.mxu0 0.0
    %393 = vmatpush1.msra.mxu0 0.0
    %394 = vmatprep.subr.mxu0 0.0
    %395 = vmatpush1.msra.mxu0 0.0
    %396 = vmatprep.subr.mxu0 0.0
    %397 = vmatpush1.msra.mxu0 0.0
    %398 = vmatprep.subr.mxu0 0.0
    %399 = vmatpush1.msra.mxu0 0.0
    %400 = vmatprep.subr.mxu0 0.0
    %401 = vmatpush1.msra.mxu0 0.0
    %402 = vmatprep.subr.mxu0 0.0
    %403 = vmatpush1.msra.mxu0 0.0
    %404 = vmatprep.subr.mxu0 0.0
    %405 = vmatpush1.msra.mxu0 0.0
    %406 = vmatprep.subr.mxu0 0.0
    %407 = vmatpush1.msra.mxu0 0.0
    %408 = vmatprep.mubr.f32.mxu0 0.0
    %409 = vmatmul.mubr.f32.gmra.mrb[0].mxu0 %v342
    %v410 = vpop.f32.mrb[0].mxu0
    %v411 = vadd.f32 0.0, %v410
    %v412 = vpop.f32.mrb[0].mxu0
    %413 = vdwg.mxu0
    %v414 = vrcp.pop %v411
    %v415 = vmul.f32 %v340, %v414
    %420 = vrot.lane.b32.xlu0 %v238, 64
    %v421 = vpop.permute.xlu0 %420
    %422 = vrot.lane.b32.xlu0 %v239, 64
    %v423 = vpop.permute.xlu0 %422
    %424 = vrot.lane.b32.xlu0 %v240, 64
    %v425 = vpop.permute.xlu0 %424
    %426 = vrot.lane.b32.xlu0 %v241, 64
    %v427 = vpop.permute.xlu0 %426
    %v433 = vsel %vm124, %v415, 0
    %435 = vmatprep.subr.mxu0 0.0
    %436 = vmatpush1.msra.mxu0 %v421
    %437 = vmatprep.subr.mxu0 0.0
    %438 = vmatpush1.msra.mxu0 %v423
    %439 = vmatprep.subr.mxu0 0.0
    %440 = vmatpush1.msra.mxu0 %v425
    %441 = vmatprep.subr.mxu0 0.0
    %442 = vmatpush1.msra.mxu0 %v427
    %443 = vmatprep.subr.mxu0 0.0
    %444 = vmatpush1.msra.mxu0 0.0
    %445 = vmatprep.subr.mxu0 0.0
    %446 = vmatpush1.msra.mxu0 0.0
    %447 = vmatprep.subr.mxu0 0.0
    %448 = vmatpush1.msra.mxu0 0.0
    %449 = vmatprep.subr.mxu0 0.0
    %450 = vmatpush1.msra.mxu0 0.0
    %451 = vmatprep.subr.mxu0 0.0
    %452 = vmatpush1.msra.mxu0 0.0
    %453 = vmatprep.subr.mxu0 0.0
    %454 = vmatpush1.msra.mxu0 0.0
    %455 = vmatprep.subr.mxu0 0.0
    %456 = vmatpush1.msra.mxu0 0.0
    %457 = vmatprep.subr.mxu0 0.0
    %458 = vmatpush1.msra.mxu0 0.0
    %459 = vmatprep.subr.mxu0 0.0
    %460 = vmatpush1.msra.mxu0 0.0
    %461 = vmatprep.subr.mxu0 0.0
    %462 = vmatpush1.msra.mxu0 0.0
    %463 = vmatprep.subr.mxu0 0.0
    %464 = vmatpush1.msra.mxu0 0.0
    %465 = vmatprep.subr.mxu0 0.0
    %466 = vmatpush1.msra.mxu0 0.0
    %467 = vmatprep.subr.mxu0 0.0
    %468 = vmatpush1.msra.mxu0 0.0
    %469 = vmatprep.subr.mxu0 0.0
    %470 = vmatpush1.msra.mxu0 0.0
    %471 = vmatprep.subr.mxu0 0.0
    %472 = vmatpush1.msra.mxu0 0.0
    %473 = vmatprep.subr.mxu0 0.0
    %474 = vmatpush1.msra.mxu0 0.0
    %475 = vmatprep.subr.mxu0 0.0
    %476 = vmatpush1.msra.mxu0 0.0
    %477 = vmatprep.subr.mxu0 0.0
    %478 = vmatpush1.msra.mxu0 0.0
    %479 = vmatprep.subr.mxu0 0.0
    %480 = vmatpush1.msra.mxu0 0.0
    %481 = vmatprep.subr.mxu0 0.0
    %482 = vmatpush1.msra.mxu0 0.0
    %483 = vmatprep.subr.mxu0 0.0
    %484 = vmatpush1.msra.mxu0 0.0
    %485 = vmatprep.subr.mxu0 0.0
    %486 = vmatpush1.msra.mxu0 0.0
    %487 = vmatprep.subr.mxu0 0.0
    %488 = vmatpush1.msra.mxu0 0.0
    %489 = vmatprep.subr.mxu0 0.0
    %490 = vmatpush1.msra.mxu0 0.0
    %491 = vmatprep.subr.mxu0 0.0
    %492 = vmatpush1.msra.mxu0 0.0
    %493 = vmatprep.subr.mxu0 0.0
    %494 = vmatpush1.msra.mxu0 0.0
    %495 = vmatprep.subr.mxu0 0.0
    %496 = vmatpush1.msra.mxu0 0.0
    %497 = vmatprep.subr.mxu0 0.0
    %498 = vmatpush1.msra.mxu0 0.0
    %499 = vmatprep.mubr.f32.mxu0 0.0
    %500 = vmatmul.mubr.f32.gmra.mrb[0].mxu0 %v433
    %v501 = vpop.f32.mrb[0].mxu0
    %v502 = vadd.f32 0.0, %v501
    %v503 = vpop.f32.mrb[0].mxu0
    %504 = vdwg.mxu0
    %v505 = vmul.f32 %v203, %v211
    %v506 = vmul.f32 %v203, %v213
    %v507 = vmul.f32 %v203, %v215
    %v508 = vmul.f32 %v203, %v217
    %v509 = vmul.f32 %v203, %v227
    %v510 = vmul.f32 %v203, %v229
    %v511 = vmul.f32 %v203, %v231
    %v512 = vmul.f32 %v203, %v233
    %517 = vrot.lane.b32.xlu0 %v505, 96
    %v518 = vpop.permute.xlu0 %517
    %519 = vrot.lane.b32.xlu0 %v506, 96
    %v520 = vpop.permute.xlu0 %519
    %521 = vrot.lane.b32.xlu0 %v507, 96
    %v522 = vpop.permute.xlu0 %521
    %523 = vrot.lane.b32.xlu0 %v508, 96
    %v524 = vpop.permute.xlu0 %523
    %v526 = vsel %vm124, %v203, 0
    %v528 = vsel %vm124, %v518, 0
    %v530 = vsel %vm124, %v520, 0
    %v532 = vsel %vm124, %v522, 0
    %v534 = vsel %vm124, %v524, 0
    %536 = vmatprep.subr.mxu0 0.0
    %537 = vmatpush1.xpose.msra.mxu0 %v528
    %538 = vmatprep.subr.mxu0 0.0
    %539 = vmatpush1.xpose.msra.mxu0 %v530
    %540 = vmatprep.subr.mxu0 0.0
    %541 = vmatpush1.xpose.msra.mxu0 %v532
    %542 = vmatprep.subr.mxu0 0.0
    %543 = vmatpush1.xpose.msra.mxu0 %v534
    %544 = vmatprep.subr.mxu0 0.0
    %545 = vmatpush1.xpose.msra.mxu0 0.0
    %546 = vmatprep.subr.mxu0 0.0
    %547 = vmatpush1.xpose.msra.mxu0 0.0
    %548 = vmatprep.subr.mxu0 0.0
    %549 = vmatpush1.xpose.msra.mxu0 0.0
    %550 = vmatprep.subr.mxu0 0.0
    %551 = vmatpush1.xpose.msra.mxu0 0.0
    %552 = vmatprep.subr.mxu0 0.0
    %553 = vmatpush1.xpose.msra.mxu0 0.0
    %554 = vmatprep.subr.mxu0 0.0
    %555 = vmatpush1.xpose.msra.mxu0 0.0
    %556 = vmatprep.subr.mxu0 0.0
    %557 = vmatpush1.xpose.msra.mxu0 0.0
    %558 = vmatprep.subr.mxu0 0.0
    %559 = vmatpush1.xpose.msra.mxu0 0.0
    %560 = vmatprep.subr.mxu0 0.0
    %561 = vmatpush1.xpose.msra.mxu0 0.0
    %562 = vmatprep.subr.mxu0 0.0
    %563 = vmatpush1.xpose.msra.mxu0 0.0
    %564 = vmatprep.subr.mxu0 0.0
    %565 = vmatpush1.xpose.msra.mxu0 0.0
    %566 = vmatprep.subr.mxu0 0.0
    %567 = vmatpush1.xpose.msra.mxu0 0.0
    %568 = vmatprep.subr.mxu0 0.0
    %569 = vmatpush1.xpose.msra.mxu0 0.0
    %570 = vmatprep.subr.mxu0 0.0
    %571 = vmatpush1.xpose.msra.mxu0 0.0
    %572 = vmatprep.subr.mxu0 0.0
    %573 = vmatpush1.xpose.msra.mxu0 0.0
    %574 = vmatprep.subr.mxu0 0.0
    %575 = vmatpush1.xpose.msra.mxu0 0.0
    %576 = vmatprep.subr.mxu0 0.0
    %577 = vmatpush1.xpose.msra.mxu0 0.0
    %578 = vmatprep.subr.mxu0 0.0
    %579 = vmatpush1.xpose.msra.mxu0 0.0
    %580 = vmatprep.subr.mxu0 0.0
    %581 = vmatpush1.xpose.msra.mxu0 0.0
    %582 = vmatprep.subr.mxu0 0.0
    %583 = vmatpush1.xpose.msra.mxu0 0.0
    %584 = vmatprep.subr.mxu0 0.0
    %585 = vmatpush1.xpose.msra.mxu0 0.0
    %586 = vmatprep.subr.mxu0 0.0
    %587 = vmatpush1.xpose.msra.mxu0 0.0
    %588 = vmatprep.subr.mxu0 0.0
    %589 = vmatpush1.xpose.msra.mxu0 0.0
    %590 = vmatprep.subr.mxu0 0.0
    %591 = vmatpush1.xpose.msra.mxu0 0.0
    %592 = vmatprep.subr.mxu0 0.0
    %593 = vmatpush1.xpose.msra.mxu0 0.0
    %594 = vmatprep.subr.mxu0 0.0
    %595 = vmatpush1.xpose.msra.mxu0 0.0
    %596 = vmatprep.subr.mxu0 0.0
    %597 = vmatpush1.xpose.msra.mxu0 0.0
    %598 = vmatprep.subr.mxu0 0.0
    %599 = vmatpush1.xpose.msra.mxu0 0.0
    %600 = vmatprep.mubr.f32.mxu0 0.0
    %601 = vmatmul.mubr.f32.gmra.mrb[0].mxu0 %v526
    %v602 = vpop.f32.mrb[0].mxu0
    %v603 = vadd.f32 0.0, %v602
    %v604 = vpop.f32.mrb[0].mxu0
    %605 = vdwg.mxu0
    %v606 = vsel %vm124, %v603, -inf
    %607 = vmax.xlane.f32.xlu0 %v606
    %v608 = vpop.xlane.xlu0 %607
    %v609 = vsub.f32 %v603, %v608
    %v610 = vmul.f32 %v609, 1.442695
    %v611 = vpow.pop %v610
    %v613 = vsel %vm124, %v611, 0
    %615 = vmatprep.subr.mxu0 0.0
    %616 = vmatpush1.msra.mxu0 %v95
    %617 = vmatprep.subr.mxu0 0.0
    %618 = vmatpush1.msra.mxu0 %v96
    %619 = vmatprep.subr.mxu0 0.0
    %620 = vmatpush1.msra.mxu0 %v97
    %621 = vmatprep.subr.mxu0 0.0
    %622 = vmatpush1.msra.mxu0 %v98
    %623 = vmatprep.subr.mxu0 0.0
    %624 = vmatpush1.msra.mxu0 0.0
    %625 = vmatprep.subr.mxu0 0.0
    %626 = vmatpush1.msra.mxu0 0.0
    %627 = vmatprep.subr.mxu0 0.0
    %628 = vmatpush1.msra.mxu0 0.0
    %629 = vmatprep.subr.mxu0 0.0
    %630 = vmatpush1.msra.mxu0 0.0
    %631 = vmatprep.subr.mxu0 0.0
    %632 = vmatpush1.msra.mxu0 0.0
    %633 = vmatprep.subr.mxu0 0.0
    %634 = vmatpush1.msra.mxu0 0.0
    %635 = vmatprep.subr.mxu0 0.0
    %636 = vmatpush1.msra.mxu0 0.0
    %637 = vmatprep.subr.mxu0 0.0
    %638 = vmatpush1.msra.mxu0 0.0
    %639 = vmatprep.subr.mxu0 0.0
    %640 = vmatpush1.msra.mxu0 0.0
    %641 = vmatprep.subr.mxu0 0.0
    %642 = vmatpush1.msra.mxu0 0.0
    %643 = vmatprep.subr.mxu0 0.0
    %644 = vmatpush1.msra.mxu0 0.0
    %645 = vmatprep.subr.mxu0 0.0
    %646 = vmatpush1.msra.mxu0 0.0
    %647 = vmatprep.subr.mxu0 0.0
    %648 = vmatpush1.msra.mxu0 0.0
    %649 = vmatprep.subr.mxu0 0.0
    %650 = vmatpush1.msra.mxu0 0.0
    %651 = vmatprep.subr.mxu0 0.0
    %652 = vmatpush1.msra.mxu0 0.0
    %653 = vmatprep.subr.mxu0 0.0
    %654 = vmatpush1.msra.mxu0 0.0
    %655 = vmatprep.subr.mxu0 0.0
    %656 = vmatpush1.msra.mxu0 0.0
    %657 = vmatprep.subr.mxu0 0.0
    %658 = vmatpush1.msra.mxu0 0.0
    %659 = vmatprep.subr.mxu0 0.0
    %660 = vmatpush1.msra.mxu0 0.0
    %661 = vmatprep.subr.mxu0 0.0
    %662 = vmatpush1.msra.mxu0 0.0
    %663 = vmatprep.subr.mxu0 0.0
    %664 = vmatpush1.msra.mxu0 0.0
    %665 = vmatprep.subr.mxu0 0.0
    %666 = vmatpush1.msra.mxu0 0.0
    %667 = vmatprep.subr.mxu0 0.0
    %668 = vmatpush1.msra.mxu0 0.0
    %669 = vmatprep.subr.mxu0 0.0
    %670 = vmatpush1.msra.mxu0 0.0
    %671 = vmatprep.subr.mxu0 0.0
    %672 = vmatpush1.msra.mxu0 0.0
    %673 = vmatprep.subr.mxu0 0.0
    %674 = vmatpush1.msra.mxu0 0.0
    %675 = vmatprep.subr.mxu0 0.0
    %676 = vmatpush1.msra.mxu0 0.0
    %677 = vmatprep.subr.mxu0 0.0
    %678 = vmatpush1.msra.mxu0 0.0
    %679 = vmatprep.mubr.f32.mxu0 0.0
    %680 = vmatmul.mubr.f32.gmra.mrb[0].mxu0 %v613
    %v681 = vpop.f32.mrb[0].mxu0
    %v682 = vadd.f32 0.0, %v681
    %v683 = vpop.f32.mrb[0].mxu0
    %684 = vdwg.mxu0
    %v685 = vrcp.pop %v682
    %v686 = vmul.f32 %v611, %v685
    %691 = vrot.lane.b32.xlu0 %v509, 64
    %v692 = vpop.permute.xlu0 %691
    %693 = vrot.lane.b32.xlu0 %v510, 64
    %v694 = vpop.permute.xlu0 %693
    %695 = vrot.lane.b32.xlu0 %v511, 64
    %v696 = vpop.permute.xlu0 %695
    %697 = vrot.lane.b32.xlu0 %v512, 64
    %v698 = vpop.permute.xlu0 %697
    %v704 = vsel %vm124, %v686, 0
    %706 = vmatprep.subr.mxu0 0.0
    %707 = vmatpush1.msra.mxu0 %v692
    %708 = vmatprep.subr.mxu0 0.0
    %709 = vmatpush1.msra.mxu0 %v694
    %710 = vmatprep.subr.mxu0 0.0
    %711 = vmatpush1.msra.mxu0 %v696
    %712 = vmatprep.subr.mxu0 0.0
    %713 = vmatpush1.msra.mxu0 %v698
    %714 = vmatprep.subr.mxu0 0.0
    %715 = vmatpush1.msra.mxu0 0.0
    %716 = vmatprep.subr.mxu0 0.0
    %717 = vmatpush1.msra.mxu0 0.0
    %718 = vmatprep.subr.mxu0 0.0
    %719 = vmatpush1.msra.mxu0 0.0
    %720 = vmatprep.subr.mxu0 0.0
    %721 = vmatpush1.msra.mxu0 0.0
    %722 = vmatprep.subr.mxu0 0.0
    %723 = vmatpush1.msra.mxu0 0.0
    %724 = vmatprep.subr.mxu0 0.0
    %725 = vmatpush1.msra.mxu0 0.0
    %726 = vmatprep.subr.mxu0 0.0
    %727 = vmatpush1.msra.mxu0 0.0
    %728 = vmatprep.subr.mxu0 0.0
    %729 = vmatpush1.msra.mxu0 0.0
    %730 = vmatprep.subr.mxu0 0.0
    %731 = vmatpush1.msra.mxu0 0.0
    %732 = vmatprep.subr.mxu0 0.0
    %733 = vmatpush1.msra.mxu0 0.0
    %734 = vmatprep.subr.mxu0 0.0
    %735 = vmatpush1.msra.mxu0 0.0
    %736 = vmatprep.subr.mxu0 0.0
    %737 = vmatpush1.msra.mxu0 0.0
    %738 = vmatprep.subr.mxu0 0.0
    %739 = vmatpush1.msra.mxu0 0.0
    %740 = vmatprep.subr.mxu0 0.0
    %741 = vmatpush1.msra.mxu0 0.0
    %742 = vmatprep.subr.mxu0 0.0
    %743 = vmatpush1.msra.mxu0 0.0
    %744 = vmatprep.subr.mxu0 0.0
    %745 = vmatpush1.msra.mxu0 0.0
    %746 = vmatprep.subr.mxu0 0.0
    %747 = vmatpush1.msra.mxu0 0.0
    %748 = vmatprep.subr.mxu0 0.0
    %749 = vmatpush1.msra.mxu0 0.0
    %750 = vmatprep.subr.mxu0 0.0
    %751 = vmatpush1.msra.mxu0 0.0
    %752 = vmatprep.subr.mxu0 0.0
    %753 = vmatpush1.msra.mxu0 0.0
    %754 = vmatprep.subr.mxu0 0.0
    %755 = vmatpush1.msra.mxu0 0.0
    %756 = vmatprep.subr.mxu0 0.0
    %757 = vmatpush1.msra.mxu0 0.0
    %758 = vmatprep.subr.mxu0 0.0
    %759 = vmatpush1.msra.mxu0 0.0
    %760 = vmatprep.subr.mxu0 0.0
    %761 = vmatpush1.msra.mxu0 0.0
    %762 = vmatprep.subr.mxu0 0.0
    %763 = vmatpush1.msra.mxu0 0.0
    %764 = vmatprep.subr.mxu0 0.0
    %765 = vmatpush1.msra.mxu0 0.0
    %766 = vmatprep.subr.mxu0 0.0
    %767 = vmatpush1.msra.mxu0 0.0
    %768 = vmatprep.subr.mxu0 0.0
    %769 = vmatpush1.msra.mxu0 0.0
    %770 = vmatprep.mubr.f32.mxu0 0.0
    %771 = vmatmul.mubr.f32.gmra.mrb[0].mxu0 %v704
    %v772 = vpop.f32.mrb[0].mxu0
    %v773 = vadd.f32 0.0, %v772
    %v774 = vpop.f32.mrb[0].mxu0
    %775 = vdwg.mxu0
    %v776 = vlaneseq
    %v777 = vshrl.u32 %v776, 7
    %v778 = vsub.s32 1, %v777
    %v779 = vrot.slane %v119, %v778
    %v781 = vsel %vm124, %v502, 0
    %v784 = vsel %vm124, %v773, 0
    %786 = vmatprep.subr.mxu0 0.0
    %787 = vmatpush1.msra.mxu0 %v103
    %788 = vmatprep.subr.mxu0 0.0
    %789 = vmatpush1.msra.mxu0 %v104
    %790 = vmatprep.subr.mxu0 0.0
    %791 = vmatpush1.msra.mxu0 %v105
    %792 = vmatprep.subr.mxu0 0.0
    %793 = vmatpush1.msra.mxu0 %v106
    %794 = vmatprep.subr.mxu0 0.0
    %795 = vmatpush1.msra.mxu0 0.0
    %796 = vmatprep.subr.mxu0 0.0
    %797 = vmatpush1.msra.mxu0 0.0
    %798 = vmatprep.subr.mxu0 0.0
    %799 = vmatpush1.msra.mxu0 0.0
    %800 = vmatprep.subr.mxu0 0.0
    %801 = vmatpush1.msra.mxu0 0.0
    %802 = vmatprep.subr.mxu0 0.0
    %803 = vmatpush1.msra.mxu0 0.0
    %804 = vmatprep.subr.mxu0 0.0
    %805 = vmatpush1.msra.mxu0 0.0
    %806 = vmatprep.subr.mxu0 0.0
    %807 = vmatpush1.msra.mxu0 0.0
    %808 = vmatprep.subr.mxu0 0.0
    %809 = vmatpush1.msra.mxu0 0.0
    %810 = vmatprep.subr.mxu0 0.0
    %811 = vmatpush1.msra.mxu0 0.0
    %812 = vmatprep.subr.mxu0 0.0
    %813 = vmatpush1.msra.mxu0 0.0
    %814 = vmatprep.subr.mxu0 0.0
    %815 = vmatpush1.msra.mxu0 0.0
    %816 = vmatprep.subr.mxu0 0.0
    %817 = vmatpush1.msra.mxu0 0.0
    %818 = vmatprep.subr.mxu0 0.0
    %819 = vmatpush1.msra.mxu0 0.0
    %820 = vmatprep.subr.mxu0 0.0
    %821 = vmatpush1.msra.mxu0 0.0
    %822 = vmatprep.subr.mxu0 0.0
    %823 = vmatpush1.msra.mxu0 0.0
    %824 = vmatprep.subr.mxu0 0.0
    %825 = vmatpush1.msra.mxu0 0.0
    %826 = vmatprep.subr.mxu0 0.0
    %827 = vmatpush1.msra.mxu0 0.0
    %828 = vmatprep.subr.mxu0 0.0
    %829 = vmatpush1.msra.mxu0 0.0
    %830 = vmatprep.subr.mxu0 0.0
    %831 = vmatpush1.msra.mxu0 0.0
    %832 = vmatprep.subr.mxu0 0.0
    %833 = vmatpush1.msra.mxu0 0.0
    %834 = vmatprep.subr.mxu0 0.0
    %835 = vmatpush1.msra.mxu0 0.0
    %836 = vmatprep.subr.mxu0 0.0
    %837 = vmatpush1.msra.mxu0 0.0
    %838 = vmatprep.subr.mxu0 0.0
    %839 = vmatpush1.msra.mxu0 0.0
    %840 = vmatprep.subr.mxu0 0.0
    %841 = vmatpush1.msra.mxu0 0.0
    %842 = vmatprep.subr.mxu0 0.0
    %843 = vmatpush1.msra.mxu0 0.0
    %844 = vmatprep.subr.mxu0 0.0
    %845 = vmatpush1.msra.mxu0 0.0
    %846 = vmatprep.subr.mxu0 0.0
    %847 = vmatpush1.msra.mxu0 0.0
    %848 = vmatprep.subr.mxu0 0.0
    %849 = vmatpush1.msra.mxu0 0.0
    %850 = vmatprep.mubr.f32.mxu0 0.0
    %851 = vmatmul.mubr.f32.gmra.mrb[0].mxu0 %v781
    %v852 = vpop.f32.mrb[0].mxu0
    %v853 = vadd.f32 %v779, %v852
    %v854 = vpop.f32.mrb[0].mxu0
    %855 = vmatprep.mubr.f32.mxu0 0.0
    %856 = vmatmul.mubr.f32.gmra.mrb[0].mxu0 %v784
    %v857 = vpop.f32.mrb[0].mxu0
    %v858 = vadd.f32 %v779, %v857
    %v859 = vpop.f32.mrb[0].mxu0
    %860 = vdwg.mxu0
    %v861 = vadd.f32 %v89, %v853
    %v862 = vadd.f32 %v90, %v858
    %v863 = vsel %vm124, %v861, 0.0
    %864 = vadd.xlane.f32.xlu0 %v863
    %v865 = vpop.xlane.xlu0 %864
    %v866 = vsel %vm124, %v862, 0.0
    %867 = vadd.xlane.f32.xlu0 %v866
    %v868 = vpop.xlane.xlu0 %867
    %v869 = vrcp.pop 32.0
    %v870 = vmul.f32 %v865, %v869
    %v871 = vmul.f32 %v868, %v869
    %v872 = vsub.f32 %v861, %v870
    %v873 = vsub.f32 %v862, %v871
    %v874 = vmul.f32 %v872, %v872
    %v875 = vmul.f32 %v873, %v873
    %v876 = vsel %vm124, %v874, 0.0
    %877 = vadd.xlane.f32.xlu0 %v876
    %v878 = vpop.xlane.xlu0 %877
    %v879 = vsel %vm124, %v875, 0.0
    %880 = vadd.xlane.f32.xlu0 %v879
    %v881 = vpop.xlane.xlu0 %880
    %v882 = vmul.f32 %v878, %v869
    %v883 = vmul.f32 %v881, %v869
    %v884 = vadd.f32 %v882, 1e-05
    %v885 = vadd.f32 %v883, 1e-05
    %v886 = vrsqrt.pop %v884
    %v887 = vrsqrt.pop %v885
    %v888 = vmul.f32 %v872, %v886
    %v889 = vmul.f32 %v873, %v887
    %v890 = vlaneseq
    %v891 = vshrl.u32 %v890, 7
    %v892 = vsub.s32 4, %v891
    %v893 = vrot.slane %v119, %v892
    %v894 = vmul.f32 %v888, %v893
    %v895 = vmul.f32 %v889, %v893
    %v896 = vlaneseq
    %v897 = vshrl.u32 %v896, 7
    %v898 = vsub.s32 5, %v897
    %v899 = vrot.slane %v119, %v898
    %v900 = vadd.f32 %v894, %v899
    %v901 = vadd.f32 %v895, %v899
    %v902 = vlaneseq
    %v903 = vshrl.u32 %v902, 7
    %v904 = vsub.s32 2, %v903
    %v905 = vrot.slane %v119, %v904
    %v907 = vsel %vm124, %v900, 0
    %v910 = vsel %vm124, %v901, 0
    %912 = vmatprep.subr.mxu0 0.0
    %913 = vmatpush1.msra.mxu0 %v107
    %914 = vmatprep.subr.mxu0 0.0
    %915 = vmatpush1.msra.mxu0 %v108
    %916 = vmatprep.subr.mxu0 0.0
    %917 = vmatpush1.msra.mxu0 %v109
    %918 = vmatprep.subr.mxu0 0.0
    %919 = vmatpush1.msra.mxu0 %v110
    %920 = vmatprep.subr.mxu0 0.0
    %921 = vmatpush1.msra.mxu0 0.0
    %922 = vmatprep.subr.mxu0 0.0
    %923 = vmatpush1.msra.mxu0 0.0
    %924 = vmatprep.subr.mxu0 0.0
    %925 = vmatpush1.msra.mxu0 0.0
    %926 = vmatprep.subr.mxu0 0.0
    %927 = vmatpush1.msra.mxu0 0.0
    %928 = vmatprep.subr.mxu0 0.0
    %929 = vmatpush1.msra.mxu0 0.0
    %930 = vmatprep.subr.mxu0 0.0
    %931 = vmatpush1.msra.mxu0 0.0
    %932 = vmatprep.subr.mxu0 0.0
    %933 = vmatpush1.msra.mxu0 0.0
    %934 = vmatprep.subr.mxu0 0.0
    %935 = vmatpush1.msra.mxu0 0.0
    %936 = vmatprep.subr.mxu0 0.0
    %937 = vmatpush1.msra.mxu0 0.0
    %938 = vmatprep.subr.mxu0 0.0
    %939 = vmatpush1.msra.mxu0 0.0
    %940 = vmatprep.subr.mxu0 0.0
    %941 = vmatpush1.msra.mxu0 0.0
    %942 = vmatprep.subr.mxu0 0.0
    %943 = vmatpush1.msra.mxu0 0.0
    %944 = vmatprep.subr.mxu0 0.0
    %945 = vmatpush1.msra.mxu0 0.0
    %946 = vmatprep.subr.mxu0 0.0
    %947 = vmatpush1.msra.mxu0 0.0
    %948 = vmatprep.subr.mxu0 0.0
    %949 = vmatpush1.msra.mxu0 0.0
    %950 = vmatprep.subr.mxu0 0.0
    %951 = vmatpush1.msra.mxu0 0.0
    %952 = vmatprep.subr.mxu0 0.0
    %953 = vmatpush1.msra.mxu0 0.0
    %954 = vmatprep.subr.mxu0 0.0
    %955 = vmatpush1.msra.mxu0 0.0
    %956 = vmatprep.subr.mxu0 0.0
    %957 = vmatpush1.msra.mxu0 0.0
    %958 = vmatprep.subr.mxu0 0.0
    %959 = vmatpush1.msra.mxu0 0.0
    %960 = vmatprep.subr.mxu0 0.0
    %961 = vmatpush1.msra.mxu0 0.0
    %962 = vmatprep.subr.mxu0 0.0
    %963 = vmatpush1.msra.mxu0 0.0
    %964 = vmatprep.subr.mxu0 0.0
    %965 = vmatpush1.msra.mxu0 0.0
    %966 = vmatprep.subr.mxu0 0.0
    %967 = vmatpush1.msra.mxu0 0.0
    %968 = vmatprep.subr.mxu0 0.0
    %969 = vmatpush1.msra.mxu0 0.0
    %970 = vmatprep.subr.mxu0 0.0
    %971 = vmatpush1.msra.mxu0 0.0
    %972 = vmatprep.subr.mxu0 0.0
    %973 = vmatpush1.msra.mxu0 0.0
    %974 = vmatprep.subr.mxu0 0.0
    %975 = vmatpush1.msra.mxu0 0.0
    %976 = vmatprep.mubr.f32.mxu0 0.0
    %977 = vmatmul.mubr.f32.gmra.mrb[0].mxu0 %v907
    %v978 = vpop.f32.mrb[0].mxu0
    %v979 = vadd.f32 %v905, %v978
    %v980 = vpop.f32.mrb[0].mxu0
    %981 = vmatprep.mubr.f32.mxu0 0.0
    %982 = vmatmul.mubr.f32.gmra.mrb[0].mxu0 %v910
    %v983 = vpop.f32.mrb[0].mxu0
    %v984 = vadd.f32 %v905, %v983
    %v985 = vpop.f32.mrb[0].mxu0
    %986 = vdwg.mxu0
    %v987 = vmax.f32 %v979, 0.0
    %v988 = vmax.f32 %v984, 0.0
    %v989 = vlaneseq
    %v990 = vshrl.u32 %v989, 7
    %v991 = vsub.s32 3, %v990
    %v992 = vrot.slane %v119, %v991
    %vm993 = vcmask 523264
    %v995 = vsel %vm993, %v987, 0
    %v998 = vsel %vm993, %v988, 0
    %1000 = vmatprep.subr.mxu0 0.0
    %1001 = vmatpush1.msra.mxu0 %v111
    %1002 = vmatprep.subr.mxu0 0.0
    %1003 = vmatpush1.msra.mxu0 %v112
    %1004 = vmatprep.subr.mxu0 0.0
    %1005 = vmatpush1.msra.mxu0 %v113
    %1006 = vmatprep.subr.mxu0 0.0
    %1007 = vmatpush1.msra.mxu0 %v114
    %1008 = vmatprep.subr.mxu0 0.0
    %1009 = vmatpush1.msra.mxu0 %v115
    %1010 = vmatprep.subr.mxu0 0.0
    %1011 = vmatpush1.msra.mxu0 %v116
    %1012 = vmatprep.subr.mxu0 0.0
    %1013 = vmatpush1.msra.mxu0 %v117
    %1014 = vmatprep.subr.mxu0 0.0
    %1015 = vmatpush1.msra.mxu0 %v118
    %1016 = vmatprep.subr.mxu0 0.0
    %1017 = vmatpush1.msra.mxu0 0.0
    %1018 = vmatprep.subr.mxu0 0.0
    %1019 = vmatpush1.msra.mxu0 0.0
    %1020 = vmatprep.subr.mxu0 0.0
    %1021 = vmatpush1.msra.mxu0 0.0
    %1022 = vmatprep.subr.mxu0 0.0
    %1023 = vmatpush1.msra.mxu0 0.0
    %1024 = vmatprep.subr.mxu0 0.0
    %1025 = vmatpush1.msra.mxu0 0.0
    %1026 = vmatprep.subr.mxu0 0.0
    %1027 = vmatpush1.msra.mxu0 0.0
    %1028 = vmatprep.subr.mxu0 0.0
    %1029 = vmatpush1.msra.mxu0 0.0
    %1030 = vmatprep.subr.mxu0 0.0
    %1031 = vmatpush1.msra.mxu0 0.0
    %1032 = vmatprep.subr.mxu0 0.0
    %1033 = vmatpush1.msra.mxu0 0.0
    %1034 = vmatprep.subr.mxu0 0.0
    %1035 = vmatpush1.msra.mxu0 0.0
    %1036 = vmatprep.subr.mxu0 0.0
    %1037 = vmatpush1.msra.mxu0 0.0
    %1038 = vmatprep.subr.mxu0 0.0
    %1039 = vmatpush1.msra.mxu0 0.0
    %1040 = vmatprep.subr.mxu0 0.0
    %1041 = vmatpush1.msra.mxu0 0.0
    %1042 = vmatprep.subr.mxu0 0.0
    %1043 = vmatpush1.msra.mxu0 0.0
    %1044 = vmatprep.subr.mxu0 0.0
    %1045 = vmatpush1.msra.mxu0 0.0
    %1046 = vmatprep.subr.mxu0 0.0
    %1047 = vmatpush1.msra.mxu0 0.0
    %1048 = vmatprep.subr.mxu0 0.0
    %1049 = vmatpush1.msra.mxu0 0.0
    %1050 = vmatprep.subr.mxu0 0.0
    %1051 = vmatpush1.msra.mxu0 0.0
    %1052 = vmatprep.subr.mxu0 0.0
    %1053 = vmatpush1.msra.mxu0 0.0
    %1054 = vmatprep.subr.mxu0 0.0
    %1055 = vmatpush1.msra.mxu0 0.0
    %1056 = vmatprep.subr.mxu0 0.0
    %1057 = vmatpush1.msra.mxu0 0.0
    %1058 = vmatprep.subr.mxu0 0.0
    %1059 = vmatpush1.msra.mxu0 0.0
    %1060 = vmatprep.subr.mxu0 0.0
    %1061 = vmatpush1.msra.mxu0 0.0
    %1062 = vmatprep.subr.mxu0 0.0
    %1063 = vmatpush1.msra.mxu0 0.0
    %1064 = vmatprep.mubr.f32.mxu0 0.0
    %1065 = vmatmul.mubr.f32.gmra.mrb[0].mxu0 %v995
    %v1066 = vpop.f32.mrb[0].mxu0
    %v1067 = vadd.f32 %v992, %v1066
    %v1068 = vpop.f32.mrb[0].mxu0
    %1069 = vmatprep.mubr.f32.mxu0 0.0
    %1070 = vmatmul.mubr.f32.gmra.mrb[0].mxu0 %v998
    %v1071 = vpop.f32.mrb[0].mxu0
    %v1072 = vadd.f32 %v992, %v1071
    %v1073 = vpop.f32.mrb[0].mxu0
    %1074 = vdwg.mxu0
    %v1075 = vadd.f32 %v900, %v1067
    %v1076 = vadd.f32 %v901, %v1072
    %v1077 = vsel %vm124, %v1075, 0.0
    %1078 = vadd.xlane.f32.xlu0 %v1077
    %v1079 = vpop.xlane.xlu0 %1078
    %v1080 = vsel %vm124, %v1076, 0.0
    %1081 = vadd.xlane.f32.xlu0 %v1080
    %v1082 = vpop.xlane.xlu0 %1081
    %v1083 = vmul.f32 %v1079, %v869
    %v1084 = vmul.f32 %v1082, %v869
    %v1085 = vsub.f32 %v1075, %v1083
    %v1086 = vsub.f32 %v1076, %v1084
    %v1087 = vmul.f32 %v1085, %v1085
    %v1088 = vmul.f32 %v1086, %v1086
    %v1089 = vsel %vm124, %v1087, 0.0
    %1090 = vadd.xlane.f32.xlu0 %v1089
    %v1091 = vpop.xlane.xlu0 %1090
    %v1092 = vsel %vm124, %v1088, 0.0
    %1093 = vadd.xlane.f32.xlu0 %v1092
    %v1094 = vpop.xlane.xlu0 %1093
    %v1095 = vmul.f32 %v1091, %v869
    %v1096 = vmul.f32 %v1094, %v869
    %v1097 = vadd.f32 %v1095, 1e-05
    %v1098 = vadd.f32 %v1096, 1e-05
    %v1099 = vrsqrt.pop %v1097
    %v1100 = vrsqrt.pop %v1098
    %v1101 = vmul.f32 %v1085, %v1099
    %v1102 = vmul.f32 %v1086, %v1100
    %v1103 = vlaneseq
    %v1104 = vshrl.u32 %v1103, 7
    %v1105 = vsub.s32 6, %v1104
    %v1106 = vrot.slane %v119, %v1105
    %v1107 = vmul.f32 %v1101, %v1106
    %v1108 = vmul.f32 %v1102, %v1106
    %v1109 = vlaneseq
    %v1110 = vshrl.u32 %v1109, 7
    %v1111 = vsub.s32 7, %v1110
    %v1112 = vrot.slane %v119, %v1111
    %v1113 = vadd.f32 %v1107, %v1112
    %v1114 = vadd.f32 %v1108, %v1112
    %s1115 = scalar_lea.vmem %s1, 32
    %v1116 = vld [vmem:[%s1115] sm:$0xff]
    %v1117 = vld [vmem:[%s1115 + $0x8] sm:$0xff]
    %v1118 = vld [vmem:[%s1115 + $0x10] sm:$0xff]
    %v1119 = vld [vmem:[%s1115 + $0x18] sm:$0xff]
    %s1120 = scalar_lea.vmem %s2, 32
    %v1121 = vld [vmem:[%s1120] sm:$0xff]
    %v1122 = vld [vmem:[%s1120 + $0x8] sm:$0xff]
    %v1123 = vld [vmem:[%s1120 + $0x10] sm:$0xff]
    %v1124 = vld [vmem:[%s1120 + $0x18] sm:$0xff]
    %s1125 = scalar_lea.vmem %s3, 32
    %v1126 = vld [vmem:[%s1125] sm:$0xff]
    %v1127 = vld [vmem:[%s1125 + $0x8] sm:$0xff]
    %v1128 = vld [vmem:[%s1125 + $0x10] sm:$0xff]
    %v1129 = vld [vmem:[%s1125 + $0x18] sm:$0xff]
    %s1130 = scalar_lea.vmem %s4, 64
    %v1131 = vld [vmem:[%s1130] sm:$0xff]
    %v1132 = vld [vmem:[%s1130 + $0x8] sm:$0xff]
    %v1133 = vld [vmem:[%s1130 + $0x10] sm:$0xff]
    %v1134 = vld [vmem:[%s1130 + $0x18] sm:$0xff]
    %v1135 = vld [vmem:[%s1130 + $0x20] sm:$0xff]
    %v1136 = vld [vmem:[%s1130 + $0x28] sm:$0xff]
    %v1137 = vld [vmem:[%s1130 + $0x30] sm:$0xff]
    %v1138 = vld [vmem:[%s1130 + $0x38] sm:$0xff]
    %s1139 = scalar_lea.vmem %s5, 8
    %v1140 = vld [vmem:[%s1139] sm:$0xff]
    %v1141 = vlaneseq
    %v1142 = vshrl.u32 %v1141, 7
    %v1143 = vsub.s32 0, %v1142
    %v1144 = vrot.slane %v1140, %v1143
    %v1146 = vsel %vm124, %v1113, 0
    %v1149 = vsel %vm124, %v1114, 0
    %1151 = vmatprep.subr.mxu0 0.0
    %1152 = vmatpush1.msra.mxu0 %v1116
    %1153 = vmatprep.subr.mxu0 0.0
    %1154 = vmatpush1.msra.mxu0 %v1117
    %1155 = vmatprep.subr.mxu0 0.0
    %1156 = vmatpush1.msra.mxu0 %v1118
    %1157 = vmatprep.subr.mxu0 0.0
    %1158 = vmatpush1.msra.mxu0 %v1119
    %1159 = vmatprep.subr.mxu0 0.0
    %1160 = vmatpush1.msra.mxu0 0.0
    %1161 = vmatprep.subr.mxu0 0.0
    %1162 = vmatpush1.msra.mxu0 0.0
    %1163 = vmatprep.subr.mxu0 0.0
    %1164 = vmatpush1.msra.mxu0 0.0
    %1165 = vmatprep.subr.mxu0 0.0
    %1166 = vmatpush1.msra.mxu0 0.0
    %1167 = vmatprep.subr.mxu0 0.0
    %1168 = vmatpush1.msra.mxu0 0.0
    %1169 = vmatprep.subr.mxu0 0.0
    %1170 = vmatpush1.msra.mxu0 0.0
    %1171 = vmatprep.subr.mxu0 0.0
    %1172 = vmatpush1.msra.mxu0 0.0
    %1173 = vmatprep.subr.mxu0 0.0
    %1174 = vmatpush1.msra.mxu0 0.0
    %1175 = vmatprep.subr.mxu0 0.0
    %1176 = vmatpush1.msra.mxu0 0.0
    %1177 = vmatprep.subr.mxu0 0.0
    %1178 = vmatpush1.msra.mxu0 0.0
    %1179 = vmatprep.subr.mxu0 0.0
    %1180 = vmatpush1.msra.mxu0 0.0
    %1181 = vmatprep.subr.mxu0 0.0
    %1182 = vmatpush1.msra.mxu0 0.0
    %1183 = vmatprep.subr.mxu0 0.0
    %1184 = vmatpush1.msra.mxu0 0.0
    %1185 = vmatprep.subr.mxu0 0.0
    %1186 = vmatpush1.msra.mxu0 0.0
    %1187 = vmatprep.subr.mxu0 0.0
    %1188 = vmatpush1.msra.mxu0 0.0
    %1189 = vmatprep.subr.mxu0 0.0
    %1190 = vmatpush1.msra.mxu0 0.0
    %1191 = vmatprep.subr.mxu0 0.0
    %1192 = vmatpush1.msra.mxu0 0.0
    %1193 = vmatprep.subr.mxu0 0.0
    %1194 = vmatpush1.msra.mxu0 0.0
    %1195 = vmatprep.subr.mxu0 0.0
    %1196 = vmatpush1.msra.mxu0 0.0
    %1197 = vmatprep.subr.mxu0 0.0
    %1198 = vmatpush1.msra.mxu0 0.0
    %1199 = vmatprep.subr.mxu0 0.0
    %1200 = vmatpush1.msra.mxu0 0.0
    %1201 = vmatprep.subr.mxu0 0.0
    %1202 = vmatpush1.msra.mxu0 0.0
    %1203 = vmatprep.subr.mxu0 0.0
    %1204 = vmatpush1.msra.mxu0 0.0
    %1205 = vmatprep.subr.mxu0 0.0
    %1206 = vmatpush1.msra.mxu0 0.0
    %1207 = vmatprep.subr.mxu0 0.0
    %1208 = vmatpush1.msra.mxu0 0.0
    %1209 = vmatprep.subr.mxu0 0.0
    %1210 = vmatpush1.msra.mxu0 0.0
    %1211 = vmatprep.subr.mxu0 0.0
    %1212 = vmatpush1.msra.mxu0 0.0
    %1213 = vmatprep.subr.mxu0 0.0
    %1214 = vmatpush1.msra.mxu0 0.0
    %1215 = vmatprep.mubr.f32.mxu0 0.0
    %1216 = vmatmul.mubr.f32.gmra.mrb[0].mxu0 %v1146
    %v1217 = vpop.f32.mrb[0].mxu0
    %v1218 = vadd.f32 %v1144, %v1217
    %v1219 = vpop.f32.mrb[0].mxu0
    %1220 = vmatprep.mubr.f32.mxu0 0.0
    %1221 = vmatmul.mubr.f32.gmra.mrb[0].mxu0 %v1149
    %v1222 = vpop.f32.mrb[0].mxu0
    %v1223 = vadd.f32 %v1144, %v1222
    %v1224 = vpop.f32.mrb[0].mxu0
    %1225 = vdwg.mxu0
    %v1226 = vmul.f32 %v1218, %v211
    %v1227 = vmul.f32 %v1218, %v213
    %v1228 = vmul.f32 %v1218, %v215
    %v1229 = vmul.f32 %v1218, %v217
    %v1230 = vmul.f32 %v1218, %v227
    %v1231 = vmul.f32 %v1218, %v229
    %v1232 = vmul.f32 %v1218, %v231
    %v1233 = vmul.f32 %v1218, %v233
    %1238 = vrot.lane.b32.xlu0 %v1226, 96
    %v1239 = vpop.permute.xlu0 %1238
    %1240 = vrot.lane.b32.xlu0 %v1227, 96
    %v1241 = vpop.permute.xlu0 %1240
    %1242 = vrot.lane.b32.xlu0 %v1228, 96
    %v1243 = vpop.permute.xlu0 %1242
    %1244 = vrot.lane.b32.xlu0 %v1229, 96
    %v1245 = vpop.permute.xlu0 %1244
    %v1247 = vsel %vm124, %v1218, 0
    %v1249 = vsel %vm124, %v1239, 0
    %v1251 = vsel %vm124, %v1241, 0
    %v1253 = vsel %vm124, %v1243, 0
    %v1255 = vsel %vm124, %v1245, 0
    %1257 = vmatprep.subr.mxu0 0.0
    %1258 = vmatpush1.xpose.msra.mxu0 %v1249
    %1259 = vmatprep.subr.mxu0 0.0
    %1260 = vmatpush1.xpose.msra.mxu0 %v1251
    %1261 = vmatprep.subr.mxu0 0.0
    %1262 = vmatpush1.xpose.msra.mxu0 %v1253
    %1263 = vmatprep.subr.mxu0 0.0
    %1264 = vmatpush1.xpose.msra.mxu0 %v1255
    %1265 = vmatprep.subr.mxu0 0.0
    %1266 = vmatpush1.xpose.msra.mxu0 0.0
    %1267 = vmatprep.subr.mxu0 0.0
    %1268 = vmatpush1.xpose.msra.mxu0 0.0
    %1269 = vmatprep.subr.mxu0 0.0
    %1270 = vmatpush1.xpose.msra.mxu0 0.0
    %1271 = vmatprep.subr.mxu0 0.0
    %1272 = vmatpush1.xpose.msra.mxu0 0.0
    %1273 = vmatprep.subr.mxu0 0.0
    %1274 = vmatpush1.xpose.msra.mxu0 0.0
    %1275 = vmatprep.subr.mxu0 0.0
    %1276 = vmatpush1.xpose.msra.mxu0 0.0
    %1277 = vmatprep.subr.mxu0 0.0
    %1278 = vmatpush1.xpose.msra.mxu0 0.0
    %1279 = vmatprep.subr.mxu0 0.0
    %1280 = vmatpush1.xpose.msra.mxu0 0.0
    %1281 = vmatprep.subr.mxu0 0.0
    %1282 = vmatpush1.xpose.msra.mxu0 0.0
    %1283 = vmatprep.subr.mxu0 0.0
    %1284 = vmatpush1.xpose.msra.mxu0 0.0
    %1285 = vmatprep.subr.mxu0 0.0
    %1286 = vmatpush1.xpose.msra.mxu0 0.0
    %1287 = vmatprep.subr.mxu0 0.0
    %1288 = vmatpush1.xpose.msra.mxu0 0.0
    %1289 = vmatprep.subr.mxu0 0.0
    %1290 = vmatpush1.xpose.msra.mxu0 0.0
    %1291 = vmatprep.subr.mxu0 0.0
    %1292 = vmatpush1.xpose.msra.mxu0 0.0
    %1293 = vmatprep.subr.mxu0 0.0
    %1294 = vmatpush1.xpose.msra.mxu0 0.0
    %1295 = vmatprep.subr.mxu0 0.0
    %1296 = vmatpush1.xpose.msra.mxu0 0.0
    %1297 = vmatprep.subr.mxu0 0.0
    %1298 = vmatpush1.xpose.msra.mxu0 0.0
    %1299 = vmatprep.subr.mxu0 0.0
    %1300 = vmatpush1.xpose.msra.mxu0 0.0
    %1301 = vmatprep.subr.mxu0 0.0
    %1302 = vmatpush1.xpose.msra.mxu0 0.0
    %1303 = vmatprep.subr.mxu0 0.0
    %1304 = vmatpush1.xpose.msra.mxu0 0.0
    %1305 = vmatprep.subr.mxu0 0.0
    %1306 = vmatpush1.xpose.msra.mxu0 0.0
    %1307 = vmatprep.subr.mxu0 0.0
    %1308 = vmatpush1.xpose.msra.mxu0 0.0
    %1309 = vmatprep.subr.mxu0 0.0
    %1310 = vmatpush1.xpose.msra.mxu0 0.0
    %1311 = vmatprep.subr.mxu0 0.0
    %1312 = vmatpush1.xpose.msra.mxu0 0.0
    %1313 = vmatprep.subr.mxu0 0.0
    %1314 = vmatpush1.xpose.msra.mxu0 0.0
    %1315 = vmatprep.subr.mxu0 0.0
    %1316 = vmatpush1.xpose.msra.mxu0 0.0
    %1317 = vmatprep.subr.mxu0 0.0
    %1318 = vmatpush1.xpose.msra.mxu0 0.0
    %1319 = vmatprep.subr.mxu0 0.0
    %1320 = vmatpush1.xpose.msra.mxu0 0.0
    %1321 = vmatprep.mubr.f32.mxu0 0.0
    %1322 = vmatmul.mubr.f32.gmra.mrb[0].mxu0 %v1247
    %v1323 = vpop.f32.mrb[0].mxu0
    %v1324 = vadd.f32 0.0, %v1323
    %v1325 = vpop.f32.mrb[0].mxu0
    %1326 = vdwg.mxu0
    %v1327 = vsel %vm124, %v1324, -inf
    %1328 = vmax.xlane.f32.xlu0 %v1327
    %v1329 = vpop.xlane.xlu0 %1328
    %v1330 = vsub.f32 %v1324, %v1329
    %v1331 = vmul.f32 %v1330, 1.442695
    %v1332 = vpow.pop %v1331
    %v1334 = vsel %vm124, %v1332, 0
    %1336 = vmatprep.subr.mxu0 0.0
    %1337 = vmatpush1.msra.mxu0 %v95
    %1338 = vmatprep.subr.mxu0 0.0
    %1339 = vmatpush1.msra.mxu0 %v96
    %1340 = vmatprep.subr.mxu0 0.0
    %1341 = vmatpush1.msra.mxu0 %v97
    %1342 = vmatprep.subr.mxu0 0.0
    %1343 = vmatpush1.msra.mxu0 %v98
    %1344 = vmatprep.subr.mxu0 0.0
    %1345 = vmatpush1.msra.mxu0 0.0
    %1346 = vmatprep.subr.mxu0 0.0
    %1347 = vmatpush1.msra.mxu0 0.0
    %1348 = vmatprep.subr.mxu0 0.0
    %1349 = vmatpush1.msra.mxu0 0.0
    %1350 = vmatprep.subr.mxu0 0.0
    %1351 = vmatpush1.msra.mxu0 0.0
    %1352 = vmatprep.subr.mxu0 0.0
    %1353 = vmatpush1.msra.mxu0 0.0
    %1354 = vmatprep.subr.mxu0 0.0
    %1355 = vmatpush1.msra.mxu0 0.0
    %1356 = vmatprep.subr.mxu0 0.0
    %1357 = vmatpush1.msra.mxu0 0.0
    %1358 = vmatprep.subr.mxu0 0.0
    %1359 = vmatpush1.msra.mxu0 0.0
    %1360 = vmatprep.subr.mxu0 0.0
    %1361 = vmatpush1.msra.mxu0 0.0
    %1362 = vmatprep.subr.mxu0 0.0
    %1363 = vmatpush1.msra.mxu0 0.0
    %1364 = vmatprep.subr.mxu0 0.0
    %1365 = vmatpush1.msra.mxu0 0.0
    %1366 = vmatprep.subr.mxu0 0.0
    %1367 = vmatpush1.msra.mxu0 0.0
    %1368 = vmatprep.subr.mxu0 0.0
    %1369 = vmatpush1.msra.mxu0 0.0
    %1370 = vmatprep.subr.mxu0 0.0
    %1371 = vmatpush1.msra.mxu0 0.0
    %1372 = vmatprep.subr.mxu0 0.0
    %1373 = vmatpush1.msra.mxu0 0.0
    %1374 = vmatprep.subr.mxu0 0.0
    %1375 = vmatpush1.msra.mxu0 0.0
    %1376 = vmatprep.subr.mxu0 0.0
    %1377 = vmatpush1.msra.mxu0 0.0
    %1378 = vmatprep.subr.mxu0 0.0
    %1379 = vmatpush1.msra.mxu0 0.0
    %1380 = vmatprep.subr.mxu0 0.0
    %1381 = vmatpush1.msra.mxu0 0.0
    %1382 = vmatprep.subr.mxu0 0.0
    %1383 = vmatpush1.msra.mxu0 0.0
    %1384 = vmatprep.subr.mxu0 0.0
    %1385 = vmatpush1.msra.mxu0 0.0
    %1386 = vmatprep.subr.mxu0 0.0
    %1387 = vmatpush1.msra.mxu0 0.0
    %1388 = vmatprep.subr.mxu0 0.0
    %1389 = vmatpush1.msra.mxu0 0.0
    %1390 = vmatprep.subr.mxu0 0.0
    %1391 = vmatpush1.msra.mxu0 0.0
    %1392 = vmatprep.subr.mxu0 0.0
    %1393 = vmatpush1.msra.mxu0 0.0
    %1394 = vmatprep.subr.mxu0 0.0
    %1395 = vmatpush1.msra.mxu0 0.0
    %1396 = vmatprep.subr.mxu0 0.0
    %1397 = vmatpush1.msra.mxu0 0.0
    %1398 = vmatprep.subr.mxu0 0.0
    %1399 = vmatpush1.msra.mxu0 0.0
    %1400 = vmatprep.mubr.f32.mxu0 0.0
    %1401 = vmatmul.mubr.f32.gmra.mrb[0].mxu0 %v1334
    %v1402 = vpop.f32.mrb[0].mxu0
    %v1403 = vadd.f32 0.0, %v1402
    %v1404 = vpop.f32.mrb[0].mxu0
    %1405 = vdwg.mxu0
    %v1406 = vrcp.pop %v1403
    %v1407 = vmul.f32 %v1332, %v1406
    %1412 = vrot.lane.b32.xlu0 %v1230, 64
    %v1413 = vpop.permute.xlu0 %1412
    %1414 = vrot.lane.b32.xlu0 %v1231, 64
    %v1415 = vpop.permute.xlu0 %1414
    %1416 = vrot.lane.b32.xlu0 %v1232, 64
    %v1417 = vpop.permute.xlu0 %1416
    %1418 = vrot.lane.b32.xlu0 %v1233, 64
    %v1419 = vpop.permute.xlu0 %1418
    %v1425 = vsel %vm124, %v1407, 0
    %1427 = vmatprep.subr.mxu0 0.0
    %1428 = vmatpush1.msra.mxu0 %v1413
    %1429 = vmatprep.subr.mxu0 0.0
    %1430 = vmatpush1.msra.mxu0 %v1415
    %1431 = vmatprep.subr.mxu0 0.0
    %1432 = vmatpush1.msra.mxu0 %v1417
    %1433 = vmatprep.subr.mxu0 0.0
    %1434 = vmatpush1.msra.mxu0 %v1419
    %1435 = vmatprep.subr.mxu0 0.0
    %1436 = vmatpush1.msra.mxu0 0.0
    %1437 = vmatprep.subr.mxu0 0.0
    %1438 = vmatpush1.msra.mxu0 0.0
    %1439 = vmatprep.subr.mxu0 0.0
    %1440 = vmatpush1.msra.mxu0 0.0
    %1441 = vmatprep.subr.mxu0 0.0
    %1442 = vmatpush1.msra.mxu0 0.0
    %1443 = vmatprep.subr.mxu0 0.0
    %1444 = vmatpush1.msra.mxu0 0.0
    %1445 = vmatprep.subr.mxu0 0.0
    %1446 = vmatpush1.msra.mxu0 0.0
    %1447 = vmatprep.subr.mxu0 0.0
    %1448 = vmatpush1.msra.mxu0 0.0
    %1449 = vmatprep.subr.mxu0 0.0
    %1450 = vmatpush1.msra.mxu0 0.0
    %1451 = vmatprep.subr.mxu0 0.0
    %1452 = vmatpush1.msra.mxu0 0.0
    %1453 = vmatprep.subr.mxu0 0.0
    %1454 = vmatpush1.msra.mxu0 0.0
    %1455 = vmatprep.subr.mxu0 0.0
    %1456 = vmatpush1.msra.mxu0 0.0
    %1457 = vmatprep.subr.mxu0 0.0
    %1458 = vmatpush1.msra.mxu0 0.0
    %1459 = vmatprep.subr.mxu0 0.0
    %1460 = vmatpush1.msra.mxu0 0.0
    %1461 = vmatprep.subr.mxu0 0.0
    %1462 = vmatpush1.msra.mxu0 0.0
    %1463 = vmatprep.subr.mxu0 0.0
    %1464 = vmatpush1.msra.mxu0 0.0
    %1465 = vmatprep.subr.mxu0 0.0
    %1466 = vmatpush1.msra.mxu0 0.0
    %1467 = vmatprep.subr.mxu0 0.0
    %1468 = vmatpush1.msra.mxu0 0.0
    %1469 = vmatprep.subr.mxu0 0.0
    %1470 = vmatpush1.msra.mxu0 0.0
    %1471 = vmatprep.subr.mxu0 0.0
    %1472 = vmatpush1.msra.mxu0 0.0
    %1473 = vmatprep.subr.mxu0 0.0
    %1474 = vmatpush1.msra.mxu0 0.0
    %1475 = vmatprep.subr.mxu0 0.0
    %1476 = vmatpush1.msra.mxu0 0.0
    %1477 = vmatprep.subr.mxu0 0.0
    %1478 = vmatpush1.msra.mxu0 0.0
    %1479 = vmatprep.subr.mxu0 0.0
    %1480 = vmatpush1.msra.mxu0 0.0
    %1481 = vmatprep.subr.mxu0 0.0
    %1482 = vmatpush1.msra.mxu0 0.0
    %1483 = vmatprep.subr.mxu0 0.0
    %1484 = vmatpush1.msra.mxu0 0.0
    %1485 = vmatprep.subr.mxu0 0.0
    %1486 = vmatpush1.msra.mxu0 0.0
    %1487 = vmatprep.subr.mxu0 0.0
    %1488 = vmatpush1.msra.mxu0 0.0
    %1489 = vmatprep.subr.mxu0 0.0
    %1490 = vmatpush1.msra.mxu0 0.0
    %1491 = vmatprep.mubr.f32.mxu0 0.0
    %1492 = vmatmul.mubr.f32.gmra.mrb[0].mxu0 %v1425
    %v1493 = vpop.f32.mrb[0].mxu0
    %v1494 = vadd.f32 0.0, %v1493
    %v1495 = vpop.f32.mrb[0].mxu0
    %1496 = vdwg.mxu0
    %v1497 = vmul.f32 %v1223, %v211
    %v1498 = vmul.f32 %v1223, %v213
    %v1499 = vmul.f32 %v1223, %v215
    %v1500 = vmul.f32 %v1223, %v217
    %v1501 = vmul.f32 %v1223, %v227
    %v1502 = vmul.f32 %v1223, %v229
    %v1503 = vmul.f32 %v1223, %v231
    %v1504 = vmul.f32 %v1223, %v233
    %1509 = vrot.lane.b32.xlu0 %v1497, 96
    %v1510 = vpop.permute.xlu0 %1509
    %1511 = vrot.lane.b32.xlu0 %v1498, 96
    %v1512 = vpop.permute.xlu0 %1511
    %1513 = vrot.lane.b32.xlu0 %v1499, 96
    %v1514 = vpop.permute.xlu0 %1513
    %1515 = vrot.lane.b32.xlu0 %v1500, 96
    %v1516 = vpop.permute.xlu0 %1515
    %v1518 = vsel %vm124, %v1223, 0
    %v1520 = vsel %vm124, %v1510, 0
    %v1522 = vsel %vm124, %v1512, 0
    %v1524 = vsel %vm124, %v1514, 0
    %v1526 = vsel %vm124, %v1516, 0
    %1528 = vmatprep.subr.mxu0 0.0
    %1529 = vmatpush1.xpose.msra.mxu0 %v1520
    %1530 = vmatprep.subr.mxu0 0.0
    %1531 = vmatpush1.xpose.msra.mxu0 %v1522
    %1532 = vmatprep.subr.mxu0 0.0
    %1533 = vmatpush1.xpose.msra.mxu0 %v1524
    %1534 = vmatprep.subr.mxu0 0.0
    %1535 = vmatpush1.xpose.msra.mxu0 %v1526
    %1536 = vmatprep.subr.mxu0 0.0
    %1537 = vmatpush1.xpose.msra.mxu0 0.0
    %1538 = vmatprep.subr.mxu0 0.0
    %1539 = vmatpush1.xpose.msra.mxu0 0.0
    %1540 = vmatprep.subr.mxu0 0.0
    %1541 = vmatpush1.xpose.msra.mxu0 0.0
    %1542 = vmatprep.subr.mxu0 0.0
    %1543 = vmatpush1.xpose.msra.mxu0 0.0
    %1544 = vmatprep.subr.mxu0 0.0
    %1545 = vmatpush1.xpose.msra.mxu0 0.0
    %1546 = vmatprep.subr.mxu0 0.0
    %1547 = vmatpush1.xpose.msra.mxu0 0.0
    %1548 = vmatprep.subr.mxu0 0.0
    %1549 = vmatpush1.xpose.msra.mxu0 0.0
    %1550 = vmatprep.subr.mxu0 0.0
    %1551 = vmatpush1.xpose.msra.mxu0 0.0
    %1552 = vmatprep.subr.mxu0 0.0
    %1553 = vmatpush1.xpose.msra.mxu0 0.0
    %1554 = vmatprep.subr.mxu0 0.0
    %1555 = vmatpush1.xpose.msra.mxu0 0.0
    %1556 = vmatprep.subr.mxu0 0.0
    %1557 = vmatpush1.xpose.msra.mxu0 0.0
    %1558 = vmatprep.subr.mxu0 0.0
    %1559 = vmatpush1.xpose.msra.mxu0 0.0
    %1560 = vmatprep.subr.mxu0 0.0
    %1561 = vmatpush1.xpose.msra.mxu0 0.0
    %1562 = vmatprep.subr.mxu0 0.0
    %1563 = vmatpush1.xpose.msra.mxu0 0.0
    %1564 = vmatprep.subr.mxu0 0.0
    %1565 = vmatpush1.xpose.msra.mxu0 0.0
    %1566 = vmatprep.subr.mxu0 0.0
    %1567 = vmatpush1.xpose.msra.mxu0 0.0
    %1568 = vmatprep.subr.mxu0 0.0
    %1569 = vmatpush1.xpose.msra.mxu0 0.0
    %1570 = vmatprep.subr.mxu0 0.0
    %1571 = vmatpush1.xpose.msra.mxu0 0.0
    %1572 = vmatprep.subr.mxu0 0.0
    %1573 = vmatpush1.xpose.msra.mxu0 0.0
    %1574 = vmatprep.subr.mxu0 0.0
    %1575 = vmatpush1.xpose.msra.mxu0 0.0
    %1576 = vmatprep.subr.mxu0 0.0
    %1577 = vmatpush1.xpose.msra.mxu0 0.0
    %1578 = vmatprep.subr.mxu0 0.0
    %1579 = vmatpush1.xpose.msra.mxu0 0.0
    %1580 = vmatprep.subr.mxu0 0.0
    %1581 = vmatpush1.xpose.msra.mxu0 0.0
    %1582 = vmatprep.subr.mxu0 0.0
    %1583 = vmatpush1.xpose.msra.mxu0 0.0
    %1584 = vmatprep.subr.mxu0 0.0
    %1585 = vmatpush1.xpose.msra.mxu0 0.0
    %1586 = vmatprep.subr.mxu0 0.0
    %1587 = vmatpush1.xpose.msra.mxu0 0.0
    %1588 = vmatprep.subr.mxu0 0.0
    %1589 = vmatpush1.xpose.msra.mxu0 0.0
    %1590 = vmatprep.subr.mxu0 0.0
    %1591 = vmatpush1.xpose.msra.mxu0 0.0
    %1592 = vmatprep.mubr.f32.mxu0 0.0
    %1593 = vmatmul.mubr.f32.gmra.mrb[0].mxu0 %v1518
    %v1594 = vpop.f32.mrb[0].mxu0
    %v1595 = vadd.f32 0.0, %v1594
    %v1596 = vpop.f32.mrb[0].mxu0
    %1597 = vdwg.mxu0
    %v1598 = vsel %vm124, %v1595, -inf
    %1599 = vmax.xlane.f32.xlu0 %v1598
    %v1600 = vpop.xlane.xlu0 %1599
    %v1601 = vsub.f32 %v1595, %v1600
    %v1602 = vmul.f32 %v1601, 1.442695
    %v1603 = vpow.pop %v1602
    %v1605 = vsel %vm124, %v1603, 0
    %1607 = vmatprep.subr.mxu0 0.0
    %1608 = vmatpush1.msra.mxu0 %v95
    %1609 = vmatprep.subr.mxu0 0.0
    %1610 = vmatpush1.msra.mxu0 %v96
    %1611 = vmatprep.subr.mxu0 0.0
    %1612 = vmatpush1.msra.mxu0 %v97
    %1613 = vmatprep.subr.mxu0 0.0
    %1614 = vmatpush1.msra.mxu0 %v98
    %1615 = vmatprep.subr.mxu0 0.0
    %1616 = vmatpush1.msra.mxu0 0.0
    %1617 = vmatprep.subr.mxu0 0.0
    %1618 = vmatpush1.msra.mxu0 0.0
    %1619 = vmatprep.subr.mxu0 0.0
    %1620 = vmatpush1.msra.mxu0 0.0
    %1621 = vmatprep.subr.mxu0 0.0
    %1622 = vmatpush1.msra.mxu0 0.0
    %1623 = vmatprep.subr.mxu0 0.0
    %1624 = vmatpush1.msra.mxu0 0.0
    %1625 = vmatprep.subr.mxu0 0.0
    %1626 = vmatpush1.msra.mxu0 0.0
    %1627 = vmatprep.subr.mxu0 0.0
    %1628 = vmatpush1.msra.mxu0 0.0
    %1629 = vmatprep.subr.mxu0 0.0
    %1630 = vmatpush1.msra.mxu0 0.0
    %1631 = vmatprep.subr.mxu0 0.0
    %1632 = vmatpush1.msra.mxu0 0.0
    %1633 = vmatprep.subr.mxu0 0.0
    %1634 = vmatpush1.msra.mxu0 0.0
    %1635 = vmatprep.subr.mxu0 0.0
    %1636 = vmatpush1.msra.mxu0 0.0
    %1637 = vmatprep.subr.mxu0 0.0
    %1638 = vmatpush1.msra.mxu0 0.0
    %1639 = vmatprep.subr.mxu0 0.0
    %1640 = vmatpush1.msra.mxu0 0.0
    %1641 = vmatprep.subr.mxu0 0.0
    %1642 = vmatpush1.msra.mxu0 0.0
    %1643 = vmatprep.subr.mxu0 0.0
    %1644 = vmatpush1.msra.mxu0 0.0
    %1645 = vmatprep.subr.mxu0 0.0
    %1646 = vmatpush1.msra.mxu0 0.0
    %1647 = vmatprep.subr.mxu0 0.0
    %1648 = vmatpush1.msra.mxu0 0.0
    %1649 = vmatprep.subr.mxu0 0.0
    %1650 = vmatpush1.msra.mxu0 0.0
    %1651 = vmatprep.subr.mxu0 0.0
    %1652 = vmatpush1.msra.mxu0 0.0
    %1653 = vmatprep.subr.mxu0 0.0
    %1654 = vmatpush1.msra.mxu0 0.0
    %1655 = vmatprep.subr.mxu0 0.0
    %1656 = vmatpush1.msra.mxu0 0.0
    %1657 = vmatprep.subr.mxu0 0.0
    %1658 = vmatpush1.msra.mxu0 0.0
    %1659 = vmatprep.subr.mxu0 0.0
    %1660 = vmatpush1.msra.mxu0 0.0
    %1661 = vmatprep.subr.mxu0 0.0
    %1662 = vmatpush1.msra.mxu0 0.0
    %1663 = vmatprep.subr.mxu0 0.0
    %1664 = vmatpush1.msra.mxu0 0.0
    %1665 = vmatprep.subr.mxu0 0.0
    %1666 = vmatpush1.msra.mxu0 0.0
    %1667 = vmatprep.subr.mxu0 0.0
    %1668 = vmatpush1.msra.mxu0 0.0
    %1669 = vmatprep.subr.mxu0 0.0
    %1670 = vmatpush1.msra.mxu0 0.0
    %1671 = vmatprep.mubr.f32.mxu0 0.0
    %1672 = vmatmul.mubr.f32.gmra.mrb[0].mxu0 %v1605
    %v1673 = vpop.f32.mrb[0].mxu0
    %v1674 = vadd.f32 0.0, %v1673
    %v1675 = vpop.f32.mrb[0].mxu0
    %1676 = vdwg.mxu0
    %v1677 = vrcp.pop %v1674
    %v1678 = vmul.f32 %v1603, %v1677
    %1683 = vrot.lane.b32.xlu0 %v1501, 64
    %v1684 = vpop.permute.xlu0 %1683
    %1685 = vrot.lane.b32.xlu0 %v1502, 64
    %v1686 = vpop.permute.xlu0 %1685
    %1687 = vrot.lane.b32.xlu0 %v1503, 64
    %v1688 = vpop.permute.xlu0 %1687
    %1689 = vrot.lane.b32.xlu0 %v1504, 64
    %v1690 = vpop.permute.xlu0 %1689
    %v1696 = vsel %vm124, %v1678, 0
    %1698 = vmatprep.subr.mxu0 0.0
    %1699 = vmatpush1.msra.mxu0 %v1684
    %1700 = vmatprep.subr.mxu0 0.0
    %1701 = vmatpush1.msra.mxu0 %v1686
    %1702 = vmatprep.subr.mxu0 0.0
    %1703 = vmatpush1.msra.mxu0 %v1688
    %1704 = vmatprep.subr.mxu0 0.0
    %1705 = vmatpush1.msra.mxu0 %v1690
    %1706 = vmatprep.subr.mxu0 0.0
    %1707 = vmatpush1.msra.mxu0 0.0
    %1708 = vmatprep.subr.mxu0 0.0
    %1709 = vmatpush1.msra.mxu0 0.0
    %1710 = vmatprep.subr.mxu0 0.0
    %1711 = vmatpush1.msra.mxu0 0.0
    %1712 = vmatprep.subr.mxu0 0.0
    %1713 = vmatpush1.msra.mxu0 0.0
    %1714 = vmatprep.subr.mxu0 0.0
    %1715 = vmatpush1.msra.mxu0 0.0
    %1716 = vmatprep.subr.mxu0 0.0
    %1717 = vmatpush1.msra.mxu0 0.0
    %1718 = vmatprep.subr.mxu0 0.0
    %1719 = vmatpush1.msra.mxu0 0.0
    %1720 = vmatprep.subr.mxu0 0.0
    %1721 = vmatpush1.msra.mxu0 0.0
    %1722 = vmatprep.subr.mxu0 0.0
    %1723 = vmatpush1.msra.mxu0 0.0
    %1724 = vmatprep.subr.mxu0 0.0
    %1725 = vmatpush1.msra.mxu0 0.0
    %1726 = vmatprep.subr.mxu0 0.0
    %1727 = vmatpush1.msra.mxu0 0.0
    %1728 = vmatprep.subr.mxu0 0.0
    %1729 = vmatpush1.msra.mxu0 0.0
    %1730 = vmatprep.subr.mxu0 0.0
    %1731 = vmatpush1.msra.mxu0 0.0
    %1732 = vmatprep.subr.mxu0 0.0
    %1733 = vmatpush1.msra.mxu0 0.0
    %1734 = vmatprep.subr.mxu0 0.0
    %1735 = vmatpush1.msra.mxu0 0.0
    %1736 = vmatprep.subr.mxu0 0.0
    %1737 = vmatpush1.msra.mxu0 0.0
    %1738 = vmatprep.subr.mxu0 0.0
    %1739 = vmatpush1.msra.mxu0 0.0
    %1740 = vmatprep.subr.mxu0 0.0
    %1741 = vmatpush1.msra.mxu0 0.0
    %1742 = vmatprep.subr.mxu0 0.0
    %1743 = vmatpush1.msra.mxu0 0.0
    %1744 = vmatprep.subr.mxu0 0.0
    %1745 = vmatpush1.msra.mxu0 0.0
    %1746 = vmatprep.subr.mxu0 0.0
    %1747 = vmatpush1.msra.mxu0 0.0
    %1748 = vmatprep.subr.mxu0 0.0
    %1749 = vmatpush1.msra.mxu0 0.0
    %1750 = vmatprep.subr.mxu0 0.0
    %1751 = vmatpush1.msra.mxu0 0.0
    %1752 = vmatprep.subr.mxu0 0.0
    %1753 = vmatpush1.msra.mxu0 0.0
    %1754 = vmatprep.subr.mxu0 0.0
    %1755 = vmatpush1.msra.mxu0 0.0
    %1756 = vmatprep.subr.mxu0 0.0
    %1757 = vmatpush1.msra.mxu0 0.0
    %1758 = vmatprep.subr.mxu0 0.0
    %1759 = vmatpush1.msra.mxu0 0.0
    %1760 = vmatprep.subr.mxu0 0.0
    %1761 = vmatpush1.msra.mxu0 0.0
    %1762 = vmatprep.mubr.f32.mxu0 0.0
    %1763 = vmatmul.mubr.f32.gmra.mrb[0].mxu0 %v1696
    %v1764 = vpop.f32.mrb[0].mxu0
    %v1765 = vadd.f32 0.0, %v1764
    %v1766 = vpop.f32.mrb[0].mxu0
    %1767 = vdwg.mxu0
    %v1768 = vlaneseq
    %v1769 = vshrl.u32 %v1768, 7
    %v1770 = vsub.s32 1, %v1769
    %v1771 = vrot.slane %v1140, %v1770
    %v1773 = vsel %vm124, %v1494, 0
    %v1776 = vsel %vm124, %v1765, 0
    %1778 = vmatprep.subr.mxu0 0.0
    %1779 = vmatpush1.msra.mxu0 %v1121
    %1780 = vmatprep.subr.mxu0 0.0
    %1781 = vmatpush1.msra.mxu0 %v1122
    %1782 = vmatprep.subr.mxu0 0.0
    %1783 = vmatpush1.msra.mxu0 %v1123
    %1784 = vmatprep.subr.mxu0 0.0
    %1785 = vmatpush1.msra.mxu0 %v1124
    %1786 = vmatprep.subr.mxu0 0.0
    %1787 = vmatpush1.msra.mxu0 0.0
    %1788 = vmatprep.subr.mxu0 0.0
    %1789 = vmatpush1.msra.mxu0 0.0
    %1790 = vmatprep.subr.mxu0 0.0
    %1791 = vmatpush1.msra.mxu0 0.0
    %1792 = vmatprep.subr.mxu0 0.0
    %1793 = vmatpush1.msra.mxu0 0.0
    %1794 = vmatprep.subr.mxu0 0.0
    %1795 = vmatpush1.msra.mxu0 0.0
    %1796 = vmatprep.subr.mxu0 0.0
    %1797 = vmatpush1.msra.mxu0 0.0
    %1798 = vmatprep.subr.mxu0 0.0
    %1799 = vmatpush1.msra.mxu0 0.0
    %1800 = vmatprep.subr.mxu0 0.0
    %1801 = vmatpush1.msra.mxu0 0.0
    %1802 = vmatprep.subr.mxu0 0.0
    %1803 = vmatpush1.msra.mxu0 0.0
    %1804 = vmatprep.subr.mxu0 0.0
    %1805 = vmatpush1.msra.mxu0 0.0
    %1806 = vmatprep.subr.mxu0 0.0
    %1807 = vmatpush1.msra.mxu0 0.0
    %1808 = vmatprep.subr.mxu0 0.0
    %1809 = vmatpush1.msra.mxu0 0.0
    %1810 = vmatprep.subr.mxu0 0.0
    %1811 = vmatpush1.msra.mxu0 0.0
    %1812 = vmatprep.subr.mxu0 0.0
    %1813 = vmatpush1.msra.mxu0 0.0
    %1814 = vmatprep.subr.mxu0 0.0
    %1815 = vmatpush1.msra.mxu0 0.0
    %1816 = vmatprep.subr.mxu0 0.0
    %1817 = vmatpush1.msra.mxu0 0.0
    %1818 = vmatprep.subr.mxu0 0.0
    %1819 = vmatpush1.msra.mxu0 0.0
    %1820 = vmatprep.subr.mxu0 0.0
    %1821 = vmatpush1.msra.mxu0 0.0
    %1822 = vmatprep.subr.mxu0 0.0
    %1823 = vmatpush1.msra.mxu0 0.0
    %1824 = vmatprep.subr.mxu0 0.0
    %1825 = vmatpush1.msra.mxu0 0.0
    %1826 = vmatprep.subr.mxu0 0.0
    %1827 = vmatpush1.msra.mxu0 0.0
    %1828 = vmatprep.subr.mxu0 0.0
    %1829 = vmatpush1.msra.mxu0 0.0
    %1830 = vmatprep.subr.mxu0 0.0
    %1831 = vmatpush1.msra.mxu0 0.0
    %1832 = vmatprep.subr.mxu0 0.0
    %1833 = vmatpush1.msra.mxu0 0.0
    %1834 = vmatprep.subr.mxu0 0.0
    %1835 = vmatpush1.msra.mxu0 0.0
    %1836 = vmatprep.subr.mxu0 0.0
    %1837 = vmatpush1.msra.mxu0 0.0
    %1838 = vmatprep.subr.mxu0 0.0
    %1839 = vmatpush1.msra.mxu0 0.0
    %1840 = vmatprep.subr.mxu0 0.0
    %1841 = vmatpush1.msra.mxu0 0.0
    %1842 = vmatprep.mubr.f32.mxu0 0.0
    %1843 = vmatmul.mubr.f32.gmra.mrb[0].mxu0 %v1773
    %v1844 = vpop.f32.mrb[0].mxu0
    %v1845 = vadd.f32 %v1771, %v1844
    %v1846 = vpop.f32.mrb[0].mxu0
    %1847 = vmatprep.mubr.f32.mxu0 0.0
    %1848 = vmatmul.mubr.f32.gmra.mrb[0].mxu0 %v1776
    %v1849 = vpop.f32.mrb[0].mxu0
    %v1850 = vadd.f32 %v1771, %v1849
    %v1851 = vpop.f32.mrb[0].mxu0
    %1852 = vdwg.mxu0
    %v1853 = vadd.f32 %v1113, %v1845
    %v1854 = vadd.f32 %v1114, %v1850
    %v1855 = vsel %vm124, %v1853, 0.0
    %1856 = vadd.xlane.f32.xlu0 %v1855
    %v1857 = vpop.xlane.xlu0 %1856
    %v1858 = vsel %vm124, %v1854, 0.0
    %1859 = vadd.xlane.f32.xlu0 %v1858
    %v1860 = vpop.xlane.xlu0 %1859
    %v1861 = vmul.f32 %v1857, %v869
    %v1862 = vmul.f32 %v1860, %v869
    %v1863 = vsub.f32 %v1853, %v1861
    %v1864 = vsub.f32 %v1854, %v1862
    %v1865 = vmul.f32 %v1863, %v1863
    %v1866 = vmul.f32 %v1864, %v1864
    %v1867 = vsel %vm124, %v1865, 0.0
    %1868 = vadd.xlane.f32.xlu0 %v1867
    %v1869 = vpop.xlane.xlu0 %1868
    %v1870 = vsel %vm124, %v1866, 0.0
    %1871 = vadd.xlane.f32.xlu0 %v1870
    %v1872 = vpop.xlane.xlu0 %1871
    %v1873 = vmul.f32 %v1869, %v869
    %v1874 = vmul.f32 %v1872, %v869
    %v1875 = vadd.f32 %v1873, 1e-05
    %v1876 = vadd.f32 %v1874, 1e-05
    %v1877 = vrsqrt.pop %v1875
    %v1878 = vrsqrt.pop %v1876
    %v1879 = vmul.f32 %v1863, %v1877
    %v1880 = vmul.f32 %v1864, %v1878
    %v1881 = vlaneseq
    %v1882 = vshrl.u32 %v1881, 7
    %v1883 = vsub.s32 4, %v1882
    %v1884 = vrot.slane %v1140, %v1883
    %v1885 = vmul.f32 %v1879, %v1884
    %v1886 = vmul.f32 %v1880, %v1884
    %v1887 = vlaneseq
    %v1888 = vshrl.u32 %v1887, 7
    %v1889 = vsub.s32 5, %v1888
    %v1890 = vrot.slane %v1140, %v1889
    %v1891 = vadd.f32 %v1885, %v1890
    %v1892 = vadd.f32 %v1886, %v1890
    %v1893 = vlaneseq
    %v1894 = vshrl.u32 %v1893, 7
    %v1895 = vsub.s32 2, %v1894
    %v1896 = vrot.slane %v1140, %v1895
    %v1898 = vsel %vm124, %v1891, 0
    %v1901 = vsel %vm124, %v1892, 0
    %1903 = vmatprep.subr.mxu0 0.0
    %1904 = vmatpush1.msra.mxu0 %v1126
    %1905 = vmatprep.subr.mxu0 0.0
    %1906 = vmatpush1.msra.mxu0 %v1127
    %1907 = vmatprep.subr.mxu0 0.0
    %1908 = vmatpush1.msra.mxu0 %v1128
    %1909 = vmatprep.subr.mxu0 0.0
    %1910 = vmatpush1.msra.mxu0 %v1129
    %1911 = vmatprep.subr.mxu0 0.0
    %1912 = vmatpush1.msra.mxu0 0.0
    %1913 = vmatprep.subr.mxu0 0.0
    %1914 = vmatpush1.msra.mxu0 0.0
    %1915 = vmatprep.subr.mxu0 0.0
    %1916 = vmatpush1.msra.mxu0 0.0
    %1917 = vmatprep.subr.mxu0 0.0
    %1918 = vmatpush1.msra.mxu0 0.0
    %1919 = vmatprep.subr.mxu0 0.0
    %1920 = vmatpush1.msra.mxu0 0.0
    %1921 = vmatprep.subr.mxu0 0.0
    %1922 = vmatpush1.msra.mxu0 0.0
    %1923 = vmatprep.subr.mxu0 0.0
    %1924 = vmatpush1.msra.mxu0 0.0
    %1925 = vmatprep.subr.mxu0 0.0
    %1926 = vmatpush1.msra.mxu0 0.0
    %1927 = vmatprep.subr.mxu0 0.0
    %1928 = vmatpush1.msra.mxu0 0.0
    %1929 = vmatprep.subr.mxu0 0.0
    %1930 = vmatpush1.msra.mxu0 0.0
    %1931 = vmatprep.subr.mxu0 0.0
    %1932 = vmatpush1.msra.mxu0 0.0
    %1933 = vmatprep.subr.mxu0 0.0
    %1934 = vmatpush1.msra.mxu0 0.0
    %1935 = vmatprep.subr.mxu0 0.0
    %1936 = vmatpush1.msra.mxu0 0.0
    %1937 = vmatprep.subr.mxu0 0.0
    %1938 = vmatpush1.msra.mxu0 0.0
    %1939 = vmatprep.subr.mxu0 0.0
    %1940 = vmatpush1.msra.mxu0 0.0
    %1941 = vmatprep.subr.mxu0 0.0
    %1942 = vmatpush1.msra.mxu0 0.0
    %1943 = vmatprep.subr.mxu0 0.0
    %1944 = vmatpush1.msra.mxu0 0.0
    %1945 = vmatprep.subr.mxu0 0.0
    %1946 = vmatpush1.msra.mxu0 0.0
    %1947 = vmatprep.subr.mxu0 0.0
    %1948 = vmatpush1.msra.mxu0 0.0
    %1949 = vmatprep.subr.mxu0 0.0
    %1950 = vmatpush1.msra.mxu0 0.0
    %1951 = vmatprep.subr.mxu0 0.0
    %1952 = vmatpush1.msra.mxu0 0.0
    %1953 = vmatprep.subr.mxu0 0.0
    %1954 = vmatpush1.msra.mxu0 0.0
    %1955 = vmatprep.subr.mxu0 0.0
    %1956 = vmatpush1.msra.mxu0 0.0
    %1957 = vmatprep.subr.mxu0 0.0
    %1958 = vmatpush1.msra.mxu0 0.0
    %1959 = vmatprep.subr.mxu0 0.0
    %1960 = vmatpush1.msra.mxu0 0.0
    %1961 = vmatprep.subr.mxu0 0.0
    %1962 = vmatpush1.msra.mxu0 0.0
    %1963 = vmatprep.subr.mxu0 0.0
    %1964 = vmatpush1.msra.mxu0 0.0
    %1965 = vmatprep.subr.mxu0 0.0
    %1966 = vmatpush1.msra.mxu0 0.0
    %1967 = vmatprep.mubr.f32.mxu0 0.0
    %1968 = vmatmul.mubr.f32.gmra.mrb[0].mxu0 %v1898
    %v1969 = vpop.f32.mrb[0].mxu0
    %v1970 = vadd.f32 %v1896, %v1969
    %v1971 = vpop.f32.mrb[0].mxu0
    %1972 = vmatprep.mubr.f32.mxu0 0.0
    %1973 = vmatmul.mubr.f32.gmra.mrb[0].mxu0 %v1901
    %v1974 = vpop.f32.mrb[0].mxu0
    %v1975 = vadd.f32 %v1896, %v1974
    %v1976 = vpop.f32.mrb[0].mxu0
    %1977 = vdwg.mxu0
    %v1978 = vmax.f32 %v1970, 0.0
    %v1979 = vmax.f32 %v1975, 0.0
    %v1980 = vlaneseq
    %v1981 = vshrl.u32 %v1980, 7
    %v1982 = vsub.s32 3, %v1981
    %v1983 = vrot.slane %v1140, %v1982
    %v1985 = vsel %vm993, %v1978, 0
    %v1988 = vsel %vm993, %v1979, 0
    %1990 = vmatprep.subr.mxu0 0.0
    %1991 = vmatpush1.msra.mxu0 %v1131
    %1992 = vmatprep.subr.mxu0 0.0
    %1993 = vmatpush1.msra.mxu0 %v1132
    %1994 = vmatprep.subr.mxu0 0.0
    %1995 = vmatpush1.msra.mxu0 %v1133
    %1996 = vmatprep.subr.mxu0 0.0
    %1997 = vmatpush1.msra.mxu0 %v1134
    %1998 = vmatprep.subr.mxu0 0.0
    %1999 = vmatpush1.msra.mxu0 %v1135
    %2000 = vmatprep.subr.mxu0 0.0
    %2001 = vmatpush1.msra.mxu0 %v1136
    %2002 = vmatprep.subr.mxu0 0.0
    %2003 = vmatpush1.msra.mxu0 %v1137
    %2004 = vmatprep.subr.mxu0 0.0
    %2005 = vmatpush1.msra.mxu0 %v1138
    %2006 = vmatprep.subr.mxu0 0.0
    %2007 = vmatpush1.msra.mxu0 0.0
    %2008 = vmatprep.subr.mxu0 0.0
    %2009 = vmatpush1.msra.mxu0 0.0
    %2010 = vmatprep.subr.mxu0 0.0
    %2011 = vmatpush1.msra.mxu0 0.0
    %2012 = vmatprep.subr.mxu0 0.0
    %2013 = vmatpush1.msra.mxu0 0.0
    %2014 = vmatprep.subr.mxu0 0.0
    %2015 = vmatpush1.msra.mxu0 0.0
    %2016 = vmatprep.subr.mxu0 0.0
    %2017 = vmatpush1.msra.mxu0 0.0
    %2018 = vmatprep.subr.mxu0 0.0
    %2019 = vmatpush1.msra.mxu0 0.0
    %2020 = vmatprep.subr.mxu0 0.0
    %2021 = vmatpush1.msra.mxu0 0.0
    %2022 = vmatprep.subr.mxu0 0.0
    %2023 = vmatpush1.msra.mxu0 0.0
    %2024 = vmatprep.subr.mxu0 0.0
    %2025 = vmatpush1.msra.mxu0 0.0
    %2026 = vmatprep.subr.mxu0 0.0
    %2027 = vmatpush1.msra.mxu0 0.0
    %2028 = vmatprep.subr.mxu0 0.0
    %2029 = vmatpush1.msra.mxu0 0.0
    %2030 = vmatprep.subr.mxu0 0.0
    %2031 = vmatpush1.msra.mxu0 0.0
    %2032 = vmatprep.subr.mxu0 0.0
    %2033 = vmatpush1.msra.mxu0 0.0
    %2034 = vmatprep.subr.mxu0 0.0
    %2035 = vmatpush1.msra.mxu0 0.0
    %2036 = vmatprep.subr.mxu0 0.0
    %2037 = vmatpush1.msra.mxu0 0.0
    %2038 = vmatprep.subr.mxu0 0.0
    %2039 = vmatpush1.msra.mxu0 0.0
    %2040 = vmatprep.subr.mxu0 0.0
    %2041 = vmatpush1.msra.mxu0 0.0
    %2042 = vmatprep.subr.mxu0 0.0
    %2043 = vmatpush1.msra.mxu0 0.0
    %2044 = vmatprep.subr.mxu0 0.0
    %2045 = vmatpush1.msra.mxu0 0.0
    %2046 = vmatprep.subr.mxu0 0.0
    %2047 = vmatpush1.msra.mxu0 0.0
    %2048 = vmatprep.subr.mxu0 0.0
    %2049 = vmatpush1.msra.mxu0 0.0
    %2050 = vmatprep.subr.mxu0 0.0
    %2051 = vmatpush1.msra.mxu0 0.0
    %2052 = vmatprep.subr.mxu0 0.0
    %2053 = vmatpush1.msra.mxu0 0.0
    %2054 = vmatprep.mubr.f32.mxu0 0.0
    %2055 = vmatmul.mubr.f32.gmra.mrb[0].mxu0 %v1985
    %v2056 = vpop.f32.mrb[0].mxu0
    %v2057 = vadd.f32 %v1983, %v2056
    %v2058 = vpop.f32.mrb[0].mxu0
    %2059 = vmatprep.mubr.f32.mxu0 0.0
    %2060 = vmatmul.mubr.f32.gmra.mrb[0].mxu0 %v1988
    %v2061 = vpop.f32.mrb[0].mxu0
    %v2062 = vadd.f32 %v1983, %v2061
    %v2063 = vpop.f32.mrb[0].mxu0
    %2064 = vdwg.mxu0
    %v2065 = vadd.f32 %v1891, %v2057
    %v2066 = vadd.f32 %v1892, %v2062
    %v2067 = vsel %vm124, %v2065, 0.0
    %2068 = vadd.xlane.f32.xlu0 %v2067
    %v2069 = vpop.xlane.xlu0 %2068
    %v2070 = vsel %vm124, %v2066, 0.0
    %2071 = vadd.xlane.f32.xlu0 %v2070
    %v2072 = vpop.xlane.xlu0 %2071
    %v2073 = vmul.f32 %v2069, %v869
    %v2074 = vmul.f32 %v2072, %v869
    %v2075 = vsub.f32 %v2065, %v2073
    %v2076 = vsub.f32 %v2066, %v2074
    %v2077 = vmul.f32 %v2075, %v2075
    %v2078 = vmul.f32 %v2076, %v2076
    %v2079 = vsel %vm124, %v2077, 0.0
    %2080 = vadd.xlane.f32.xlu0 %v2079
    %v2081 = vpop.xlane.xlu0 %2080
    %v2082 = vsel %vm124, %v2078, 0.0
    %2083 = vadd.xlane.f32.xlu0 %v2082
    %v2084 = vpop.xlane.xlu0 %2083
    %v2085 = vmul.f32 %v2081, %v869
    %v2086 = vmul.f32 %v2084, %v869
    %v2087 = vadd.f32 %v2085, 1e-05
    %v2088 = vadd.f32 %v2086, 1e-05
    %v2089 = vrsqrt.pop %v2087
    %v2090 = vrsqrt.pop %v2088
    %v2091 = vmul.f32 %v2075, %v2089
    %v2092 = vmul.f32 %v2076, %v2090
    %v2093 = vlaneseq
    %v2094 = vshrl.u32 %v2093, 7
    %v2095 = vsub.s32 6, %v2094
    %v2096 = vrot.slane %v1140, %v2095
    %v2097 = vmul.f32 %v2091, %v2096
    %v2098 = vmul.f32 %v2092, %v2096
    %v2099 = vlaneseq
    %v2100 = vshrl.u32 %v2099, 7
    %v2101 = vsub.s32 7, %v2100
    %v2102 = vrot.slane %v1140, %v2101
    %v2103 = vadd.f32 %v2097, %v2102
    %v2104 = vadd.f32 %v2098, %v2102
    %v2105 = vld [vmem:[#allocation5] sm:$0x1]
    %v2106 = vld [vmem:[#allocation5 + $0x1] sm:$0x1]
    %v2107 = vsel %vm124, %v2103, 0.0
    %2108 = vadd.xlane.f32.xlu0 %v2107
    %v2109 = vpop.xlane.xlu0 %2108
    %v2110 = vsel %vm124, %v2104, 0.0
    %2111 = vadd.xlane.f32.xlu0 %v2110
    %v2112 = vpop.xlane.xlu0 %2111
    %v2113 = vmul.f32 %v2109, %v869
    %v2114 = vmul.f32 %v2112, %v869
    %v2115 = vsub.f32 %v2103, %v2113
    %v2116 = vsub.f32 %v2104, %v2114
    %v2117 = vmul.f32 %v2115, %v2115
    %v2118 = vmul.f32 %v2116, %v2116
    %v2119 = vsel %vm124, %v2117, 0.0
    %2120 = vadd.xlane.f32.xlu0 %v2119
    %v2121 = vpop.xlane.xlu0 %2120
    %v2122 = vsel %vm124, %v2118, 0.0
    %2123 = vadd.xlane.f32.xlu0 %v2122
    %v2124 = vpop.xlane.xlu0 %2123
    %v2125 = vmul.f32 %v2121, %v869
    %v2126 = vmul.f32 %v2124, %v869
    %v2127 = vadd.f32 %v2125, 1e-05
    %v2128 = vadd.f32 %v2126, 1e-05
    %v2129 = vrsqrt.pop %v2127
    %v2130 = vrsqrt.pop %v2128
    %v2131 = vmul.f32 %v2115, %v2129
    %v2132 = vmul.f32 %v2116, %v2130
    %v2133 = vlaneseq
    %v2134 = vshrl.u32 %v2133, 7
    %v2135 = vsub.s32 0, %v2134
    %v2136 = vrot.slane %v2105, %v2135
    %v2137 = vmul.f32 %v2131, %v2136
    %v2138 = vmul.f32 %v2132, %v2136
    %v2139 = vlaneseq
    %v2140 = vshrl.u32 %v2139, 7
    %v2141 = vsub.s32 0, %v2140
    %v2142 = vrot.slane %v2106, %v2141
    %v2143 = vadd.f32 %v2137, %v2142
    %v2144 = vadd.f32 %v2138, %v2142
    %2146 = vrot.lane.b32.xlu0 %v2144, 32
    %v2147 = vpop.permute.xlu0 %2146
    %v2149 = vsel %vm124, %v2143, %v2147
    %2150 = vst.msk [vmem:[#allocation10] sm:$0xff] %vm993, %v2149
    %2151 = vrot.lane.b32.xlu0 %v686, 32
    %v2152 = vpop.permute.xlu0 %2151
    %2154 = vrot.lane.b32.xlu0 %v1407, 64
    %v2155 = vpop.permute.xlu0 %2154
    %2157 = vrot.lane.b32.xlu0 %v1678, 96
    %v2158 = vpop.permute.xlu0 %2157
    %v2160 = vsel %vm124, %v415, %v2152
    %v2161 = vsel %vm993, %v2160, %v2155
    %vm2162 = vcmask 785408
    %v2163 = vsel %vm2162, %v2161, %v2158
    %2164 = vst [vmem:[#allocation11] sm:$0xff] %v2163
    // Predicated region
    $region54: #{tpu_custom_call.1} parent=1 // pred_check
      _
    $region55: #{tpu_custom_call.1} parent=1 // pred_check_branch
      %2166 = sbr.rel (0) target = $region57
    $region56: #{tpu_custom_call.1} parent=1 // pred_region
      %s2168 = ssub.s32 128, 128
      %2169 = vsyncadd [#allocation4], %s2168
      %s2171 = sshll.u32 [#allocation10], 4
      %s2172 = int_to_ptr.vmem [resolvable:$true] %s2171
      %2174 = dma.vmem_to_hbm [thread:$0]  %s2172, 128, %s9, [#allocation4]
    $region57: #{tpu_custom_call.1} parent=1 // pred_fallthru
      _
    // Predicated region
    $region58: #{tpu_custom_call.1} parent=1 // pred_check
      _
    $region59: #{tpu_custom_call.1} parent=1 // pred_check_branch
      %2176 = sbr.rel (0) target = $region61
    $region60: #{tpu_custom_call.1} parent=1 // pred_region
      %s2178 = ssub.s32 128, 128
      %2179 = vsyncadd [#allocation12], %s2178
      %s2181 = sshll.u32 [#allocation11], 4
      %s2182 = int_to_ptr.vmem [resolvable:$true] %s2181
      %2184 = dma.vmem_to_hbm [thread:$0]  %s2182, 128, %s10, [#allocation12]
    $region61: #{tpu_custom_call.1} parent=1 // pred_fallthru
      _
    // Predicated region
    $region62: #{tpu_custom_call.1} parent=1 // pred_check
      _
    $region63: #{tpu_custom_call.1} parent=1 // pred_check_branch
      %2186 = sbr.rel (0) target = $region65
    $region64: #{tpu_custom_call.1} parent=1 // pred_region
      %2187 = dma.done [#allocation4], 128
    $region65: #{tpu_custom_call.1} parent=1 // pred_fallthru
      _
    // Predicated region
    $region66: #{tpu_custom_call.1} parent=1 // pred_check
      _
    $region67: #{tpu_custom_call.1} parent=1 // pred_check_branch
      %2189 = sbr.rel (0) target = $region69
    $region68: #{tpu_custom_call.1} parent=1 // pred_region
      %2190 = dma.done [#allocation12], 128
    $region69: #{tpu_custom_call.1} parent=1 // pred_fallthru
      _
    %2191 = vsyncpa [#allocation3], 1
    %2192 = vsyncpa [#allocation6], 1
    %2193 = vsyncpa [#allocation9], 1
    %2194 = vsyncpa [#allocation4], 1
    %2195 = vsyncpa [#allocation12], 1

</llo_original>
